<compile_context>
chip_gen: v6e
topology: v6e:2x2x1
jax: 0.10.0
libtpu: 0.0.40
codegen_flags: <defaults>
</compile_context>

<pallas_src>
import functools

import jax
import jax.numpy as jnp
from jax.experimental import pallas as pl
from jax.experimental.pallas import tpu as pltpu

# MXU operand dtype (accumulation is always f32 via preferred_element_type).
MXU_DTYPE = jnp.bfloat16


# ----------------------------- shared math helpers --------------------------

def _round_up(n, m):
    return (n + m - 1) // m * m


def _layernorm(x, g, b, eps=1e-5):
    mu = jnp.mean(x, axis=-1, keepdims=True)
    var = jnp.mean((x - mu) ** 2, axis=-1, keepdims=True)
    return (x - mu) * jax.lax.rsqrt(var + eps) * g + b


def _selu(x):
    alpha = 1.6732632423543772
    scale = 1.0507009873554805
    return scale * jnp.where(x > 0, x, alpha * (jnp.exp(x) - 1.0))


@functools.lru_cache(maxsize=1)
def _vmem_limit_bytes():
    """Per-chip VMEM budget: generous on v5e/v6e (128 MiB), safe on v7x (64 MiB)."""
    MiB = 1024 * 1024
    try:
        cap = int(pltpu.get_tpu_info().vmem_capacity_bytes)
    except Exception:
        cap = 64 * MiB                      # conservative fallback = v7x physical
    return int(max(32 * MiB, min(cap - 16 * MiB, 100 * MiB)))


# ----------------------------- kernel A: segmented means --------------------

def gmlp_sums_kernel(x_ref, lo_c_ref, hi_c_ref, invc_ref,
                     ln1_g_ref, ln1_b_ref, w1z2_ref, b1z2_ref,
                     ln2_g_ref, ln2_b_ref, means_ref):
    t = pl.program_id(0)
    G = means_ref.shape[0]
    TR = x_ref.shape[0]
    row0 = t * TR                           # first global (padded) row of tile

    @pl.when(t == 0)
    def _():
        means_ref[...] = jnp.zeros_like(means_ref)

    x = x_ref[...]                                                # (TR, d_model)
    xn = _layernorm(x, ln1_g_ref[...], ln1_b_ref[...])
    # Only the z2 half of proj1 is needed for the segmented mean.
    z2 = _selu(jnp.dot(xn.astype(MXU_DTYPE), w1z2_ref[...],
                       preferred_element_type=jnp.float32) + b1z2_ref[...])
    z2n = _layernorm(z2, ln2_g_ref[...], ln2_b_ref[...])          # (TR, d2)

    # (G, TR) contiguous-group membership mask, built directly in the MXU
    # dtype (0/1 exact in bf16).  Padded rows (r >= R) match no group.
    r = row0 + jax.lax.broadcasted_iota(jnp.int32, (G, TR), 1)
    oh_gt = jnp.logical_and(r >= lo_c_ref[...], r < hi_c_ref[...]).astype(MXU_DTYPE)
    means_ref[...] += jnp.dot(oh_gt, z2n.astype(MXU_DTYPE),
                              preferred_element_type=jnp.float32)

    # sums -> means on the last row tile (1/max(count,1): zero-count safe).
    @pl.when(t == pl.num_programs(0) - 1)
    def _():
        means_ref[...] = means_ref[...] * invc_ref[...]


def _gmlp_sums(xp, lo_c, hi_c, invc, p, *, tr):
    Rp, d_model = xp.shape
    d2 = p['w2'].shape[0]
    G = invc.shape[0]
    T = Rp // tr
    full = lambda shape: pl.BlockSpec(shape, lambda t: (0, 0))

    # bf16 weights in HBM (cast once per forward, not per grid step); only the
    # z2 half of proj1 is DMA'd for this pass.
    w1z2 = p['w1'].astype(MXU_DTYPE)[:, d2:]
    b1z2 = p['b1'][:, d2:]

    return pl.pallas_call(
        gmlp_sums_kernel,
        out_shape=jax.ShapeDtypeStruct((G, d2), jnp.float32),
        grid=(T,),
        in_specs=[
            pl.BlockSpec((tr, d_model), lambda t: (t, 0)),   # x row tile
            full((G, 1)), full((G, 1)),                      # group lo/hi (cols)
            full((G, 1)),                                    # 1 / count
            full((1, d_model)), full((1, d_model)),          # LayerNorm1
            full((d_model, d2)), full((1, d2)),              # proj1 (z2 half)
            full((1, d2)), full((1, d2)),                    # LayerNorm2
        ],
        out_specs=full((G, d2)),                             # resident accumulator
        compiler_params=pltpu.CompilerParams(
            # Shared accumulator across row tiles -> sequential.
            dimension_semantics=("arbitrary",),
            vmem_limit_bytes=_vmem_limit_bytes(),
        ),
    )(xp, lo_c, hi_c, invc, p['ln1_g'], p['ln1_b'], w1z2, b1z2,
      p['ln2_g'], p['ln2_b'])


# ----------------------------- kernel B: gate + proj2 + residual ------------

def gmlp_out_kernel(x_ref, means_ref, lo_r_ref, hi_r_ref, alpha_ref,
                    ln1_g_ref, ln1_b_ref, w1_ref, b1_ref,
                    ln2_g_ref, ln2_b_ref, w2_ref, b2_ref, out_ref):
    t = pl.program_id(0)
    TR = x_ref.shape[0]
    G = lo_r_ref.shape[1]
    d2 = w2_ref.shape[0]
    row0 = t * TR

    x = x_ref[...]                                                # (TR, d_model)
    xn = _layernorm(x, ln1_g_ref[...], ln1_b_ref[...])
    # Fused proj1: one MXU dot; the halves are static lane slices.
    z = _selu(jnp.dot(xn.astype(MXU_DTYPE), w1_ref[...],
                      preferred_element_type=jnp.float32) + b1_ref[...])
    z2n = _layernorm(z[:, d2:], ln2_g_ref[...], ln2_b_ref[...])   # (TR, d2)

    # (TR, G) one-hot gather of each row's group mean: one MXU dot.
    r = row0 + jax.lax.broadcasted_iota(jnp.int32, (TR, G), 0)
    oh_tg = jnp.logical_and(r >= lo_r_ref[...], r < hi_r_ref[...]).astype(MXU_DTYPE)
    mean_rows = jnp.dot(oh_tg, means_ref[...].astype(MXU_DTYPE),
                        preferred_element_type=jnp.float32)       # (TR, d2)

    gate = 1.0 + alpha_ref[0, 0] * z2n + mean_rows
    y = jnp.dot((z[:, :d2] * gate).astype(MXU_DTYPE), w2_ref[...],
                preferred_element_type=jnp.float32) + b2_ref[...]
    out_ref[...] = x + y


def _gmlp_out(xp, means, lo_r, hi_r, p, *, tr):
    Rp, d_model = xp.shape
    d_ffn = p['w1'].shape[1]
    d2 = d_ffn // 2
    G = means.shape[0]
    T = Rp // tr
    full = lambda shape: pl.BlockSpec(shape, lambda t: (0, 0))
    row = lambda shape: pl.BlockSpec(shape, lambda t: (t, 0))

    return pl.pallas_call(
        gmlp_out_kernel,
        out_shape=jax.ShapeDtypeStruct((Rp, d_model), xp.dtype),
        grid=(T,),
        in_specs=[
            row((tr, d_model)),                              # x row tile (aliased out)
            full((G, d2)),                                   # group means
            full((1, G)), full((1, G)),                      # group lo/hi (rows)
            pl.BlockSpec((1, 1), lambda t: (0, 0),
                         memory_space=pltpu.MemorySpace.SMEM),  # alpha scalar
            full((1, d_model)), full((1, d_model)),          # LayerNorm1
            full((d_model, d_ffn)), full((1, d_ffn)),        # fused proj1 W, b
            full((1, d2)), full((1, d2)),                    # LayerNorm2
            full((d2, d_model)), full((1, d_model)),         # proj2 W, b
        ],
        out_specs=row((tr, d_model)),
        input_output_aliases={0: 0},                         # residual in place
        compiler_params=pltpu.CompilerParams(
            # Row tiles are independent given the means -> megacore-parallel.
            dimension_semantics=("parallel",),
            vmem_limit_bytes=_vmem_limit_bytes(),
        ),
    )(xp, means, lo_r, hi_r, p['alpha'],
      p['ln1_g'], p['ln1_b'], p['w1'].astype(MXU_DTYPE), p['b1'],
      p['ln2_g'], p['ln2_b'], p['w2'].astype(MXU_DTYPE), p['b2'])


# ----------------------------- full forward ---------------------------------

@functools.partial(jax.jit, static_argnames=("row_tile",))
def gated_mlp(x, counts, block_params, row_tile=512):
    """Apply all GatedMLPBlocks sequentially (two pallas_calls per block)."""
    R, _ = x.shape
    G = counts.shape[0]

    # Row tiling: largest tile <= row_tile that is a multiple of 8; pad R up.
    tr = int(min(row_tile, _round_up(R, 8)))
    Rp = _round_up(R, tr)
    xp = jnp.pad(x, ((0, Rp - R), (0, 0)))

    # Contiguous-group boundaries: rows [lo[g], hi[g]) belong to group g.
    off = jnp.concatenate([jnp.zeros((1,), jnp.int32),
                           jnp.cumsum(counts).astype(jnp.int32)])
    lo, hi = off[:G], off[1:]
    lo_c, hi_c = lo[:, None], hi[:, None]          # (G, 1): groups on sublanes
    lo_r, hi_r = lo[None, :], hi[None, :]          # (1, G): groups on lanes
    invc = (1.0 / jnp.maximum(counts, 1).astype(jnp.float32))[:, None]

    for p in block_params:
        means = _gmlp_sums(xp, lo_c, hi_c, invc, p, tr=tr)   # (G, d2) group means
        xp = _gmlp_out(xp, means, lo_r, hi_r, p, tr=tr)      # residual update
    return xp[:R]


# ----------------------------- parameter init (deterministic, synthetic) ----

def init_block_params(key, d_model, d_ffn):
    d2 = d_ffn // 2
    k = jax.random.split(key, 4)
    w1 = jax.random.normal(k[0], (d_model, d_ffn), jnp.float32) / jnp.sqrt(d_model)
    b1 = jax.random.normal(k[1], (1, d_ffn), jnp.float32) * 0.01
    w2 = jax.random.normal(k[2], (d2, d_model), jnp.float32) / jnp.sqrt(d2)
    b2 = jax.random.normal(k[3], (1, d_model), jnp.float32) * 0.01
    return dict(
        ln1_g=jnp.ones((1, d_model), jnp.float32),
        ln1_b=jnp.zeros((1, d_model), jnp.float32),
        w1=w1, b1=b1,                               # fused proj1 (d_model, d_ffn)
        ln2_g=jnp.ones((1, d2), jnp.float32),
        ln2_b=jnp.zeros((1, d2), jnp.float32),
        alpha=jnp.full((1, 1), 0.01, jnp.float32),
        # NOTE: SpacialGatingUnit also defines `beta`, unused in forward().
        w2=w2, b2=b2,
    )


# ----------------------------- pure-JAX reference ---------------------------

def gated_mlp_ref(x, counts, block_params):
    """Reference forward, numerically matched to the kernel's MXU operand
    rounding (bf16 operands, f32 accumulation)."""
    R = x.shape[0]
    G = counts.shape[0]
    seg = jnp.repeat(jnp.arange(G), counts, total_repeat_length=R)
    cnt = jnp.maximum(counts, 1).astype(jnp.float32)
    rnd = lambda a: a.astype(MXU_DTYPE).astype(jnp.float32)
    for p in block_params:
        d2 = p['w2'].shape[0]
        xn = _layernorm(x, p['ln1_g'], p['ln1_b'])
        z = _selu(jnp.dot(xn.astype(MXU_DTYPE), p['w1'].astype(MXU_DTYPE),
                          preferred_element_type=jnp.float32) + p['b1'])
        z1, z2 = z[:, :d2], z[:, d2:]
        z2n = _layernorm(z2, p['ln2_g'], p['ln2_b'])
        sums = jax.ops.segment_sum(rnd(z2n), seg, num_segments=G)
        means = rnd(sums * (1.0 / cnt)[:, None])
        gate = 1.0 + p['alpha'][0, 0] * z2n + means[seg]
        x = x + jnp.dot((z1 * gate).astype(MXU_DTYPE), p['w2'].astype(MXU_DTYPE),
                        preferred_element_type=jnp.float32) + p['b2']
    return x


# ----------------------------- main ------------------------------------------

if __name__ == "__main__":
    d_model, d_ffn, num_blocks = 16, 32, 2
    counts = jnp.array([3, 5], dtype=jnp.int32)     # 2 data, total reads R = 8
    R = int(counts.sum())

    key = jax.random.PRNGKey(0)
    kx, kp = jax.random.split(key)
    x = jax.random.normal(kx, (R, d_model), jnp.float32)

    block_params = [init_block_params(k, d_model, d_ffn)
                    for k in jax.random.split(kp, num_blocks)]

    out = gated_mlp(x, counts, block_params)
    out = jax.block_until_ready(out)

    ref = gated_mlp_ref(x, counts, block_params)
    assert out.shape == x.shape
    assert jnp.allclose(out, ref, atol=2e-3, rtol=2e-3), "mismatch vs reference"

    print("KERNEL_OK")
</pallas_src>

<mosaic_0001>
module attributes {stable_mosaic.version = 11 : i64} {
  func.func @gmlp_out_kernel(%arg0: i32, %arg1: memref<8x16xf32, #tpu.memory_space<vmem>>, %arg2: memref<2x16xf32, #tpu.memory_space<vmem>>, %arg3: memref<1x2xi32, #tpu.memory_space<vmem>>, %arg4: memref<1x2xi32, #tpu.memory_space<vmem>>, %arg5: memref<1x1xf32, #tpu.memory_space<smem>>, %arg6: memref<1x16xf32, #tpu.memory_space<vmem>>, %arg7: memref<1x16xf32, #tpu.memory_space<vmem>>, %arg8: memref<16x32xbf16, #tpu.memory_space<vmem>>, %arg9: memref<1x32xf32, #tpu.memory_space<vmem>>, %arg10: memref<1x16xf32, #tpu.memory_space<vmem>>, %arg11: memref<1x16xf32, #tpu.memory_space<vmem>>, %arg12: memref<16x16xbf16, #tpu.memory_space<vmem>>, %arg13: memref<1x16xf32, #tpu.memory_space<vmem>>, %arg14: memref<8x16xf32, #tpu.memory_space<vmem>>) attributes {dimension_semantics = [#tpu.dimension_semantics<parallel>], iteration_bounds = array<i64: 1>, scalar_prefetch = 0 : i64, scratch_operands = 0 : i64, tpu.core_type = #tpu.core_type<tc>, window_params = [{transform_indices = @transform_0, window_bounds = array<i64: 8, 16>}, {pipeline_mode = #tpu.pipeline_mode<synchronous>, transform_indices = @transform_1, window_bounds = array<i64: 2, 16>}, {pipeline_mode = #tpu.pipeline_mode<synchronous>, transform_indices = @transform_2, window_bounds = array<i64: 1, 2>}, {pipeline_mode = #tpu.pipeline_mode<synchronous>, transform_indices = @transform_3, window_bounds = array<i64: 1, 2>}, {transform_indices = @transform_4, window_bounds = array<i64: 1, 1>}, {pipeline_mode = #tpu.pipeline_mode<synchronous>, transform_indices = @transform_5, window_bounds = array<i64: 1, 16>}, {pipeline_mode = #tpu.pipeline_mode<synchronous>, transform_indices = @transform_6, window_bounds = array<i64: 1, 16>}, {pipeline_mode = #tpu.pipeline_mode<synchronous>, transform_indices = @transform_7, window_bounds = array<i64: 16, 32>}, {pipeline_mode = #tpu.pipeline_mode<synchronous>, transform_indices = @transform_8, window_bounds = array<i64: 1, 32>}, {pipeline_mode = #tpu.pipeline_mode<synchronous>, transform_indices = @transform_9, window_bounds = array<i64: 1, 16>}, {pipeline_mode = #tpu.pipeline_mode<synchronous>, transform_indices = @transform_10, window_bounds = array<i64: 1, 16>}, {pipeline_mode = #tpu.pipeline_mode<synchronous>, transform_indices = @transform_11, window_bounds = array<i64: 16, 16>}, {pipeline_mode = #tpu.pipeline_mode<synchronous>, transform_indices = @transform_12, window_bounds = array<i64: 1, 16>}, {transform_indices = @transform_13, window_bounds = array<i64: 8, 16>}]} {
    %c8_i32 = arith.constant 8 : i32
    %0 = arith.muli %arg0, %c8_i32 : i32
    %c0 = arith.constant 0 : index
    %c0_0 = arith.constant 0 : index
    %1 = vector.load %arg1[%c0, %c0_0] : memref<8x16xf32, #tpu.memory_space<vmem>>, vector<8x16xf32>
    %c0_1 = arith.constant 0 : index
    %c0_2 = arith.constant 0 : index
    %2 = vector.load %arg6[%c0_1, %c0_2] : memref<1x16xf32, #tpu.memory_space<vmem>>, vector<1x16xf32>
    %c0_3 = arith.constant 0 : index
    %c0_4 = arith.constant 0 : index
    %3 = vector.load %arg7[%c0_3, %c0_4] : memref<1x16xf32, #tpu.memory_space<vmem>>, vector<1x16xf32>
    %cst = arith.constant dense<0.000000e+00> : vector<8xf32>
    %4 = vector.multi_reduction <add>, %1, %cst [1] : vector<8x16xf32> to vector<8xf32>
    %5 = vector.shape_cast %4 : vector<8xf32> to vector<8x1xf32>
    %cst_5 = arith.constant 1.600000e+01 : f32
    %6 = vector.broadcast %cst_5 : f32 to vector<8x1xf32>
    %7 = arith.divf %5, %6 : vector<8x1xf32>
    %8 = vector.broadcast %7 : vector<8x1xf32> to vector<8x16xf32>
    %9 = arith.subf %1, %8 : vector<8x16xf32>
    %10 = arith.mulf %9, %9 : vector<8x16xf32>
    %cst_6 = arith.constant dense<0.000000e+00> : vector<8xf32>
    %11 = vector.multi_reduction <add>, %10, %cst_6 [1] : vector<8x16xf32> to vector<8xf32>
    %12 = vector.shape_cast %11 : vector<8xf32> to vector<8x1xf32>
    %cst_7 = arith.constant 1.600000e+01 : f32
    %13 = vector.broadcast %cst_7 : f32 to vector<8x1xf32>
    %14 = arith.divf %12, %13 : vector<8x1xf32>
    %15 = vector.broadcast %7 : vector<8x1xf32> to vector<8x16xf32>
    %16 = arith.subf %1, %15 : vector<8x16xf32>
    %cst_8 = arith.constant 9.99999974E-6 : f32
    %17 = vector.broadcast %cst_8 : f32 to vector<8x1xf32>
    %18 = arith.addf %14, %17 : vector<8x1xf32>
    %19 = math.rsqrt %18 : vector<8x1xf32>
    %20 = vector.broadcast %19 : vector<8x1xf32> to vector<8x16xf32>
    %21 = arith.mulf %16, %20 : vector<8x16xf32>
    %22 = vector.broadcast %2 : vector<1x16xf32> to vector<8x16xf32>
    %23 = arith.mulf %21, %22 : vector<8x16xf32>
    %24 = vector.broadcast %3 : vector<1x16xf32> to vector<8x16xf32>
    %25 = arith.addf %23, %24 : vector<8x16xf32>
    %26 = arith.truncf %25 : vector<8x16xf32> to vector<8x16xbf16>
    %c0_9 = arith.constant 0 : index
    %c0_10 = arith.constant 0 : index
    %27 = vector.load %arg8[%c0_9, %c0_10] : memref<16x32xbf16, #tpu.memory_space<vmem>>, vector<16x32xbf16>
    %cst_11 = arith.constant dense<0.000000e+00> : vector<8x32xf32>
    %28 = tpu.matmul %26, %27, %cst_11 {dimension_numbers = #tpu.dot_dimension_numbers<[1], [0], [0], [1], [0, 0, 1, 1], [], []>} : vector<8x16xbf16>, vector<16x32xbf16>, vector<8x32xf32> -> vector<8x32xf32>
    %c0_12 = arith.constant 0 : index
    %c0_13 = arith.constant 0 : index
    %29 = vector.load %arg9[%c0_12, %c0_13] : memref<1x32xf32, #tpu.memory_space<vmem>>, vector<1x32xf32>
    %30 = vector.broadcast %29 : vector<1x32xf32> to vector<8x32xf32>
    %31 = arith.addf %28, %30 : vector<8x32xf32>
    %cst_14 = arith.constant 0.000000e+00 : f32
    %32 = vector.broadcast %cst_14 : f32 to vector<8x32xf32>
    %33 = arith.cmpf ogt, %31, %32 : vector<8x32xf32>
    %34 = math.exp %31 : vector<8x32xf32>
    %cst_15 = arith.constant 1.000000e+00 : f32
    %35 = vector.broadcast %cst_15 : f32 to vector<8x32xf32>
    %36 = arith.subf %34, %35 : vector<8x32xf32>
    %cst_16 = arith.constant 1.67326319 : f32
    %37 = vector.broadcast %cst_16 : f32 to vector<8x32xf32>
    %38 = arith.mulf %37, %36 : vector<8x32xf32>
    %39 = arith.select %33, %31, %38 : vector<8x32xi1>, vector<8x32xf32>
    %cst_17 = arith.constant 1.05070102 : f32
    %40 = vector.broadcast %cst_17 : f32 to vector<8x32xf32>
    %41 = arith.mulf %40, %39 : vector<8x32xf32>
    %42 = vector.extract_strided_slice %41 {offsets = [0, 16], sizes = [8, 16], strides = [1, 1]} : vector<8x32xf32> to vector<8x16xf32>
    %c0_18 = arith.constant 0 : index
    %c0_19 = arith.constant 0 : index
    %43 = vector.load %arg10[%c0_18, %c0_19] : memref<1x16xf32, #tpu.memory_space<vmem>>, vector<1x16xf32>
    %c0_20 = arith.constant 0 : index
    %c0_21 = arith.constant 0 : index
    %44 = vector.load %arg11[%c0_20, %c0_21] : memref<1x16xf32, #tpu.memory_space<vmem>>, vector<1x16xf32>
    %cst_22 = arith.constant dense<0.000000e+00> : vector<8xf32>
    %45 = vector.multi_reduction <add>, %42, %cst_22 [1] : vector<8x16xf32> to vector<8xf32>
    %46 = vector.shape_cast %45 : vector<8xf32> to vector<8x1xf32>
    %cst_23 = arith.constant 1.600000e+01 : f32
    %47 = vector.broadcast %cst_23 : f32 to vector<8x1xf32>
    %48 = arith.divf %46, %47 : vector<8x1xf32>
    %49 = vector.broadcast %48 : vector<8x1xf32> to vector<8x16xf32>
    %50 = arith.subf %42, %49 : vector<8x16xf32>
    %51 = arith.mulf %50, %50 : vector<8x16xf32>
    %cst_24 = arith.constant dense<0.000000e+00> : vector<8xf32>
    %52 = vector.multi_reduction <add>, %51, %cst_24 [1] : vector<8x16xf32> to vector<8xf32>
    %53 = vector.shape_cast %52 : vector<8xf32> to vector<8x1xf32>
    %cst_25 = arith.constant 1.600000e+01 : f32
    %54 = vector.broadcast %cst_25 : f32 to vector<8x1xf32>
    %55 = arith.divf %53, %54 : vector<8x1xf32>
    %56 = vector.broadcast %48 : vector<8x1xf32> to vector<8x16xf32>
    %57 = arith.subf %42, %56 : vector<8x16xf32>
    %cst_26 = arith.constant 9.99999974E-6 : f32
    %58 = vector.broadcast %cst_26 : f32 to vector<8x1xf32>
    %59 = arith.addf %55, %58 : vector<8x1xf32>
    %60 = math.rsqrt %59 : vector<8x1xf32>
    %61 = vector.broadcast %60 : vector<8x1xf32> to vector<8x16xf32>
    %62 = arith.mulf %57, %61 : vector<8x16xf32>
    %63 = vector.broadcast %43 : vector<1x16xf32> to vector<8x16xf32>
    %64 = arith.mulf %62, %63 : vector<8x16xf32>
    %65 = vector.broadcast %44 : vector<1x16xf32> to vector<8x16xf32>
    %66 = arith.addf %64, %65 : vector<8x16xf32>
    %67 = tpu.iota {dimensions = array<i32: 0>} : vector<8x2xi32>
    %68 = vector.broadcast %0 : i32 to vector<8x2xi32>
    %69 = arith.addi %68, %67 : vector<8x2xi32>
    %c0_27 = arith.constant 0 : index
    %c0_28 = arith.constant 0 : index
    %70 = vector.load %arg3[%c0_27, %c0_28] : memref<1x2xi32, #tpu.memory_space<vmem>>, vector<1x2xi32>
    %71 = vector.broadcast %70 : vector<1x2xi32> to vector<8x2xi32>
    %72 = arith.cmpi sge, %69, %71 : vector<8x2xi32>
    %c0_29 = arith.constant 0 : index
    %c0_30 = arith.constant 0 : index
    %73 = vector.load %arg4[%c0_29, %c0_30] : memref<1x2xi32, #tpu.memory_space<vmem>>, vector<1x2xi32>
    %74 = vector.broadcast %73 : vector<1x2xi32> to vector<8x2xi32>
    %75 = arith.cmpi slt, %69, %74 : vector<8x2xi32>
    %76 = arith.andi %72, %75 : vector<8x2xi1>
    %77 = arith.extui %76 : vector<8x2xi1> to vector<8x2xi32>
    %78 = arith.sitofp %77 : vector<8x2xi32> to vector<8x2xf32>
    %79 = arith.truncf %78 : vector<8x2xf32> to vector<8x2xbf16>
    %c0_31 = arith.constant 0 : index
    %c0_32 = arith.constant 0 : index
    %80 = vector.load %arg2[%c0_31, %c0_32] : memref<2x16xf32, #tpu.memory_space<vmem>>, vector<2x16xf32>
    %81 = arith.truncf %80 : vector<2x16xf32> to vector<2x16xbf16>
    %cst_33 = arith.constant dense<0.000000e+00> : vector<8x16xf32>
    %82 = tpu.matmul %79, %81, %cst_33 {dimension_numbers = #tpu.dot_dimension_numbers<[1], [0], [0], [1], [0, 0, 1, 1], [], []>} : vector<8x2xbf16>, vector<2x16xbf16>, vector<8x16xf32> -> vector<8x16xf32>
    %c0_34 = arith.constant 0 : index
    %c0_35 = arith.constant 0 : index
    %83 = memref.load %arg5[%c0_34, %c0_35] : memref<1x1xf32, #tpu.memory_space<smem>>
    %84 = vector.broadcast %83 : f32 to vector<8x16xf32>
    %85 = arith.mulf %84, %66 : vector<8x16xf32>
    %cst_36 = arith.constant 1.000000e+00 : f32
    %86 = vector.broadcast %cst_36 : f32 to vector<8x16xf32>
    %87 = arith.addf %86, %85 : vector<8x16xf32>
    %88 = arith.addf %87, %82 : vector<8x16xf32>
    %89 = vector.extract_strided_slice %41 {offsets = [0, 0], sizes = [8, 16], strides = [1, 1]} : vector<8x32xf32> to vector<8x16xf32>
    %90 = arith.mulf %89, %88 : vector<8x16xf32>
    %91 = arith.truncf %90 : vector<8x16xf32> to vector<8x16xbf16>
    %c0_37 = arith.constant 0 : index
    %c0_38 = arith.constant 0 : index
    %92 = vector.load %arg12[%c0_37, %c0_38] : memref<16x16xbf16, #tpu.memory_space<vmem>>, vector<16x16xbf16>
    %cst_39 = arith.constant dense<0.000000e+00> : vector<8x16xf32>
    %93 = tpu.matmul %91, %92, %cst_39 {dimension_numbers = #tpu.dot_dimension_numbers<[1], [0], [0], [1], [0, 0, 1, 1], [], []>} : vector<8x16xbf16>, vector<16x16xbf16>, vector<8x16xf32> -> vector<8x16xf32>
    %c0_40 = arith.constant 0 : index
    %c0_41 = arith.constant 0 : index
    %94 = vector.load %arg13[%c0_40, %c0_41] : memref<1x16xf32, #tpu.memory_space<vmem>>, vector<1x16xf32>
    %95 = vector.broadcast %94 : vector<1x16xf32> to vector<8x16xf32>
    %96 = arith.addf %93, %95 : vector<8x16xf32>
    %97 = arith.addf %1, %96 : vector<8x16xf32>
    %c0_42 = arith.constant 0 : index
    %c0_43 = arith.constant 0 : index
    %98 = vector.load %arg14[%c0_42, %c0_43] : memref<8x16xf32, #tpu.memory_space<vmem>>, vector<8x16xf32>
    tpu.vector_store %arg14[%c0_42, %c0_43], %97 {strides = array<i32>} : memref<8x16xf32, #tpu.memory_space<vmem>>, vector<8x16xf32>,
    return
  }
  func.func @transform_0(%arg0: i32) -> (i32, i32) {
    %c0_i32 = arith.constant 0 : i32
    %c0_i32_0 = arith.constant 0 : i32
    return %arg0, %c0_i32 : i32, i32
  }
  func.func @transform_1(%arg0: i32) -> (i32, i32) {
    %c0_i32 = arith.constant 0 : i32
    %c0_i32_0 = arith.constant 0 : i32
    %c0_i32_1 = arith.constant 0 : i32
    return %c0_i32, %c0_i32_0 : i32, i32
  }
  func.func @transform_2(%arg0: i32) -> (i32, i32) {
    %c0_i32 = arith.constant 0 : i32
    %c0_i32_0 = arith.constant 0 : i32
    %c0_i32_1 = arith.constant 0 : i32
    return %c0_i32, %c0_i32_0 : i32, i32
  }
  func.func @transform_3(%arg0: i32) -> (i32, i32) {
    %c0_i32 = arith.constant 0 : i32
    %c0_i32_0 = arith.constant 0 : i32
    %c0_i32_1 = arith.constant 0 : i32
    return %c0_i32, %c0_i32_0 : i32, i32
  }
  func.func @transform_4(%arg0: i32) -> (i32, i32) {
    %c0_i32 = arith.constant 0 : i32
    %c0_i32_0 = arith.constant 0 : i32
    %c0_i32_1 = arith.constant 0 : i32
    return %c0_i32, %c0_i32_0 : i32, i32
  }
  func.func @transform_5(%arg0: i32) -> (i32, i32) {
    %c0_i32 = arith.constant 0 : i32
    %c0_i32_0 = arith.constant 0 : i32
    %c0_i32_1 = arith.constant 0 : i32
    return %c0_i32, %c0_i32_0 : i32, i32
  }
  func.func @transform_6(%arg0: i32) -> (i32, i32) {
    %c0_i32 = arith.constant 0 : i32
    %c0_i32_0 = arith.constant 0 : i32
    %c0_i32_1 = arith.constant 0 : i32
    return %c0_i32, %c0_i32_0 : i32, i32
  }
  func.func @transform_7(%arg0: i32) -> (i32, i32) {
    %c0_i32 = arith.constant 0 : i32
    %c0_i32_0 = arith.constant 0 : i32
    %c0_i32_1 = arith.constant 0 : i32
    return %c0_i32, %c0_i32_0 : i32, i32
  }
  func.func @transform_8(%arg0: i32) -> (i32, i32) {
    %c0_i32 = arith.constant 0 : i32
    %c0_i32_0 = arith.constant 0 : i32
    %c0_i32_1 = arith.constant 0 : i32
    return %c0_i32, %c0_i32_0 : i32, i32
  }
  func.func @transform_9(%arg0: i32) -> (i32, i32) {
    %c0_i32 = arith.constant 0 : i32
    %c0_i32_0 = arith.constant 0 : i32
    %c0_i32_1 = arith.constant 0 : i32
    return %c0_i32, %c0_i32_0 : i32, i32
  }
  func.func @transform_10(%arg0: i32) -> (i32, i32) {
    %c0_i32 = arith.constant 0 : i32
    %c0_i32_0 = arith.constant 0 : i32
    %c0_i32_1 = arith.constant 0 : i32
    return %c0_i32, %c0_i32_0 : i32, i32
  }
  func.func @transform_11(%arg0: i32) -> (i32, i32) {
    %c0_i32 = arith.constant 0 : i32
    %c0_i32_0 = arith.constant 0 : i32
    %c0_i32_1 = arith.constant 0 : i32
    return %c0_i32, %c0_i32_0 : i32, i32
  }
  func.func @transform_12(%arg0: i32) -> (i32, i32) {
    %c0_i32 = arith.constant 0 : i32
    %c0_i32_0 = arith.constant 0 : i32
    %c0_i32_1 = arith.constant 0 : i32
    return %c0_i32, %c0_i32_0 : i32, i32
  }
  func.func @transform_13(%arg0: i32) -> (i32, i32) {
    %c0_i32 = arith.constant 0 : i32
    %c0_i32_0 = arith.constant 0 : i32
    return %arg0, %c0_i32 : i32, i32
  }
}

module attributes {stable_mosaic.version = 11 : i64} {
  func.func @gmlp_sums_kernel(%arg0: i32, %arg1: memref<8x16xf32, #tpu.memory_space<vmem>>, %arg2: memref<2x1xi32, #tpu.memory_space<vmem>>, %arg3: memref<2x1xi32, #tpu.memory_space<vmem>>, %arg4: memref<2x1xf32, #tpu.memory_space<vmem>>, %arg5: memref<1x16xf32, #tpu.memory_space<vmem>>, %arg6: memref<1x16xf32, #tpu.memory_space<vmem>>, %arg7: memref<16x16xbf16, #tpu.memory_space<vmem>>, %arg8: memref<1x16xf32, #tpu.memory_space<vmem>>, %arg9: memref<1x16xf32, #tpu.memory_space<vmem>>, %arg10: memref<1x16xf32, #tpu.memory_space<vmem>>, %arg11: memref<2x16xf32, #tpu.memory_space<vmem>>) attributes {dimension_semantics = [#tpu.dimension_semantics<arbitrary>], iteration_bounds = array<i64: 1>, scalar_prefetch = 0 : i64, scratch_operands = 0 : i64, tpu.core_type = #tpu.core_type<tc>, window_params = [{transform_indices = @transform_0, window_bounds = array<i64: 8, 16>}, {pipeline_mode = #tpu.pipeline_mode<synchronous>, transform_indices = @transform_1, window_bounds = array<i64: 2, 1>}, {pipeline_mode = #tpu.pipeline_mode<synchronous>, transform_indices = @transform_2, window_bounds = array<i64: 2, 1>}, {pipeline_mode = #tpu.pipeline_mode<synchronous>, transform_indices = @transform_3, window_bounds = array<i64: 2, 1>}, {pipeline_mode = #tpu.pipeline_mode<synchronous>, transform_indices = @transform_4, window_bounds = array<i64: 1, 16>}, {pipeline_mode = #tpu.pipeline_mode<synchronous>, transform_indices = @transform_5, window_bounds = array<i64: 1, 16>}, {pipeline_mode = #tpu.pipeline_mode<synchronous>, transform_indices = @transform_6, window_bounds = array<i64: 16, 16>}, {pipeline_mode = #tpu.pipeline_mode<synchronous>, transform_indices = @transform_7, window_bounds = array<i64: 1, 16>}, {pipeline_mode = #tpu.pipeline_mode<synchronous>, transform_indices = @transform_8, window_bounds = array<i64: 1, 16>}, {pipeline_mode = #tpu.pipeline_mode<synchronous>, transform_indices = @transform_9, window_bounds = array<i64: 1, 16>}, {pipeline_mode = #tpu.pipeline_mode<synchronous>, transform_indices = @transform_10, window_bounds = array<i64: 2, 16>}]} {
    %c8_i32 = arith.constant 8 : i32
    %0 = arith.muli %arg0, %c8_i32 : i32
    %c0_i32 = arith.constant 0 : i32
    %1 = arith.cmpi eq, %arg0, %c0_i32 : i32
    %2 = arith.extui %1 : i1 to i32
    %c0_i32_0 = arith.constant 0 : i32
    %3 = arith.cmpi ne, %2, %c0_i32_0 : i32
    scf.if %3 {
      %cst_39 = arith.constant 0.000000e+00 : f32
      %90 = vector.broadcast %cst_39 : f32 to vector<2x16xf32>
      %c0_40 = arith.constant 0 : index
      %c0_41 = arith.constant 0 : index
      %91 = vector.load %arg11[%c0_40, %c0_41] : memref<2x16xf32, #tpu.memory_space<vmem>>, vector<2x16xf32>
      tpu.vector_store %arg11[%c0_40, %c0_41], %90 {strides = array<i32>} : memref<2x16xf32, #tpu.memory_space<vmem>>, vector<2x16xf32>,
    } else {
    }
    %c0 = arith.constant 0 : index
    %c0_1 = arith.constant 0 : index
    %4 = vector.load %arg1[%c0, %c0_1] : memref<8x16xf32, #tpu.memory_space<vmem>>, vector<8x16xf32>
    %c0_2 = arith.constant 0 : index
    %c0_3 = arith.constant 0 : index
    %5 = vector.load %arg5[%c0_2, %c0_3] : memref<1x16xf32, #tpu.memory_space<vmem>>, vector<1x16xf32>
    %c0_4 = arith.constant 0 : index
    %c0_5 = arith.constant 0 : index
    %6 = vector.load %arg6[%c0_4, %c0_5] : memref<1x16xf32, #tpu.memory_space<vmem>>, vector<1x16xf32>
    %cst = arith.constant dense<0.000000e+00> : vector<8xf32>
    %7 = vector.multi_reduction <add>, %4, %cst [1] : vector<8x16xf32> to vector<8xf32>
    %8 = vector.shape_cast %7 : vector<8xf32> to vector<8x1xf32>
    %cst_6 = arith.constant 1.600000e+01 : f32
    %9 = vector.broadcast %cst_6 : f32 to vector<8x1xf32>
    %10 = arith.divf %8, %9 : vector<8x1xf32>
    %11 = vector.broadcast %10 : vector<8x1xf32> to vector<8x16xf32>
    %12 = arith.subf %4, %11 : vector<8x16xf32>
    %13 = arith.mulf %12, %12 : vector<8x16xf32>
    %cst_7 = arith.constant dense<0.000000e+00> : vector<8xf32>
    %14 = vector.multi_reduction <add>, %13, %cst_7 [1] : vector<8x16xf32> to vector<8xf32>
    %15 = vector.shape_cast %14 : vector<8xf32> to vector<8x1xf32>
    %cst_8 = arith.constant 1.600000e+01 : f32
    %16 = vector.broadcast %cst_8 : f32 to vector<8x1xf32>
    %17 = arith.divf %15, %16 : vector<8x1xf32>
    %18 = vector.broadcast %10 : vector<8x1xf32> to vector<8x16xf32>
    %19 = arith.subf %4, %18 : vector<8x16xf32>
    %cst_9 = arith.constant 9.99999974E-6 : f32
    %20 = vector.broadcast %cst_9 : f32 to vector<8x1xf32>
    %21 = arith.addf %17, %20 : vector<8x1xf32>
    %22 = math.rsqrt %21 : vector<8x1xf32>
    %23 = vector.broadcast %22 : vector<8x1xf32> to vector<8x16xf32>
    %24 = arith.mulf %19, %23 : vector<8x16xf32>
    %25 = vector.broadcast %5 : vector<1x16xf32> to vector<8x16xf32>
    %26 = arith.mulf %24, %25 : vector<8x16xf32>
    %27 = vector.broadcast %6 : vector<1x16xf32> to vector<8x16xf32>
    %28 = arith.addf %26, %27 : vector<8x16xf32>
    %29 = arith.truncf %28 : vector<8x16xf32> to vector<8x16xbf16>
    %c0_10 = arith.constant 0 : index
    %c0_11 = arith.constant 0 : index
    %30 = vector.load %arg7[%c0_10, %c0_11] : memref<16x16xbf16, #tpu.memory_space<vmem>>, vector<16x16xbf16>
    %cst_12 = arith.constant dense<0.000000e+00> : vector<8x16xf32>
    %31 = tpu.matmul %29, %30, %cst_12 {dimension_numbers = #tpu.dot_dimension_numbers<[1], [0], [0], [1], [0, 0, 1, 1], [], []>} : vector<8x16xbf16>, vector<16x16xbf16>, vector<8x16xf32> -> vector<8x16xf32>
    %c0_13 = arith.constant 0 : index
    %c0_14 = arith.constant 0 : index
    %32 = vector.load %arg8[%c0_13, %c0_14] : memref<1x16xf32, #tpu.memory_space<vmem>>, vector<1x16xf32>
    %33 = vector.broadcast %32 : vector<1x16xf32> to vector<8x16xf32>
    %34 = arith.addf %31, %33 : vector<8x16xf32>
    %cst_15 = arith.constant 0.000000e+00 : f32
    %35 = vector.broadcast %cst_15 : f32 to vector<8x16xf32>
    %36 = arith.cmpf ogt, %34, %35 : vector<8x16xf32>
    %37 = math.exp %34 : vector<8x16xf32>
    %cst_16 = arith.constant 1.000000e+00 : f32
    %38 = vector.broadcast %cst_16 : f32 to vector<8x16xf32>
    %39 = arith.subf %37, %38 : vector<8x16xf32>
    %cst_17 = arith.constant 1.67326319 : f32
    %40 = vector.broadcast %cst_17 : f32 to vector<8x16xf32>
    %41 = arith.mulf %40, %39 : vector<8x16xf32>
    %42 = arith.select %36, %34, %41 : vector<8x16xi1>, vector<8x16xf32>
    %cst_18 = arith.constant 1.05070102 : f32
    %43 = vector.broadcast %cst_18 : f32 to vector<8x16xf32>
    %44 = arith.mulf %43, %42 : vector<8x16xf32>
    %c0_19 = arith.constant 0 : index
    %c0_20 = arith.constant 0 : index
    %45 = vector.load %arg9[%c0_19, %c0_20] : memref<1x16xf32, #tpu.memory_space<vmem>>, vector<1x16xf32>
    %c0_21 = arith.constant 0 : index
    %c0_22 = arith.constant 0 : index
    %46 = vector.load %arg10[%c0_21, %c0_22] : memref<1x16xf32, #tpu.memory_space<vmem>>, vector<1x16xf32>
    %cst_23 = arith.constant dense<0.000000e+00> : vector<8xf32>
    %47 = vector.multi_reduction <add>, %44, %cst_23 [1] : vector<8x16xf32> to vector<8xf32>
    %48 = vector.shape_cast %47 : vector<8xf32> to vector<8x1xf32>
    %cst_24 = arith.constant 1.600000e+01 : f32
    %49 = vector.broadcast %cst_24 : f32 to vector<8x1xf32>
    %50 = arith.divf %48, %49 : vector<8x1xf32>
    %51 = vector.broadcast %50 : vector<8x1xf32> to vector<8x16xf32>
    %52 = arith.subf %44, %51 : vector<8x16xf32>
    %53 = arith.mulf %52, %52 : vector<8x16xf32>
    %cst_25 = arith.constant dense<0.000000e+00> : vector<8xf32>
    %54 = vector.multi_reduction <add>, %53, %cst_25 [1] : vector<8x16xf32> to vector<8xf32>
    %55 = vector.shape_cast %54 : vector<8xf32> to vector<8x1xf32>
    %cst_26 = arith.constant 1.600000e+01 : f32
    %56 = vector.broadcast %cst_26 : f32 to vector<8x1xf32>
    %57 = arith.divf %55, %56 : vector<8x1xf32>
    %58 = vector.broadcast %50 : vector<8x1xf32> to vector<8x16xf32>
    %59 = arith.subf %44, %58 : vector<8x16xf32>
    %cst_27 = arith.constant 9.99999974E-6 : f32
    %60 = vector.broadcast %cst_27 : f32 to vector<8x1xf32>
    %61 = arith.addf %57, %60 : vector<8x1xf32>
    %62 = math.rsqrt %61 : vector<8x1xf32>
    %63 = vector.broadcast %62 : vector<8x1xf32> to vector<8x16xf32>
    %64 = arith.mulf %59, %63 : vector<8x16xf32>
    %65 = vector.broadcast %45 : vector<1x16xf32> to vector<8x16xf32>
    %66 = arith.mulf %64, %65 : vector<8x16xf32>
    %67 = vector.broadcast %46 : vector<1x16xf32> to vector<8x16xf32>
    %68 = arith.addf %66, %67 : vector<8x16xf32>
    %69 = tpu.iota {dimensions = array<i32: 1>} : vector<2x8xi32>
    %70 = vector.broadcast %0 : i32 to vector<2x8xi32>
    %71 = arith.addi %70, %69 : vector<2x8xi32>
    %c0_28 = arith.constant 0 : index
    %c0_29 = arith.constant 0 : index
    %72 = vector.load %arg2[%c0_28, %c0_29] : memref<2x1xi32, #tpu.memory_space<vmem>>, vector<2x1xi32>
    %73 = vector.broadcast %72 : vector<2x1xi32> to vector<2x8xi32>
    %74 = arith.cmpi sge, %71, %73 : vector<2x8xi32>
    %c0_30 = arith.constant 0 : index
    %c0_31 = arith.constant 0 : index
    %75 = vector.load %arg3[%c0_30, %c0_31] : memref<2x1xi32, #tpu.memory_space<vmem>>, vector<2x1xi32>
    %76 = vector.broadcast %75 : vector<2x1xi32> to vector<2x8xi32>
    %77 = arith.cmpi slt, %71, %76 : vector<2x8xi32>
    %78 = arith.andi %74, %77 : vector<2x8xi1>
    %79 = arith.extui %78 : vector<2x8xi1> to vector<2x8xi32>
    %80 = arith.sitofp %79 : vector<2x8xi32> to vector<2x8xf32>
    %81 = arith.truncf %80 : vector<2x8xf32> to vector<2x8xbf16>
    %c0_32 = arith.constant 0 : index
    %c0_33 = arith.constant 0 : index
    %82 = vector.load %arg11[%c0_32, %c0_33] : memref<2x16xf32, #tpu.memory_space<vmem>>, vector<2x16xf32>
    %83 = arith.truncf %68 : vector<8x16xf32> to vector<8x16xbf16>
    %cst_34 = arith.constant dense<0.000000e+00> : vector<2x16xf32>
    %84 = tpu.matmul %81, %83, %cst_34 {dimension_numbers = #tpu.dot_dimension_numbers<[1], [0], [0], [1], [0, 0, 1, 1], [], []>} : vector<2x8xbf16>, vector<8x16xbf16>, vector<2x16xf32> -> vector<2x16xf32>
    %85 = arith.addf %82, %84 : vector<2x16xf32>
    %c0_35 = arith.constant 0 : index
    %c0_36 = arith.constant 0 : index
    %86 = vector.load %arg11[%c0_35, %c0_36] : memref<2x16xf32, #tpu.memory_space<vmem>>, vector<2x16xf32>
    tpu.vector_store %arg11[%c0_35, %c0_36], %85 {strides = array<i32>} : memref<2x16xf32, #tpu.memory_space<vmem>>, vector<2x16xf32>,
    %c0_i32_37 = arith.constant 0 : i32
    %87 = arith.cmpi eq, %arg0, %c0_i32_37 : i32
    %88 = arith.extui %87 : i1 to i32
    %c0_i32_38 = arith.constant 0 : i32
    %89 = arith.cmpi ne, %88, %c0_i32_38 : i32
    scf.if %89 {
      %c0_39 = arith.constant 0 : index
      %c0_40 = arith.constant 0 : index
      %90 = vector.load %arg11[%c0_39, %c0_40] : memref<2x16xf32, #tpu.memory_space<vmem>>, vector<2x16xf32>
      %c0_41 = arith.constant 0 : index
      %c0_42 = arith.constant 0 : index
      %91 = vector.load %arg4[%c0_41, %c0_42] : memref<2x1xf32, #tpu.memory_space<vmem>>, vector<2x1xf32>
      %92 = vector.broadcast %91 : vector<2x1xf32> to vector<2x16xf32>
      %93 = arith.mulf %90, %92 : vector<2x16xf32>
      %c0_43 = arith.constant 0 : index
      %c0_44 = arith.constant 0 : index
      %94 = vector.load %arg11[%c0_43, %c0_44] : memref<2x16xf32, #tpu.memory_space<vmem>>, vector<2x16xf32>
      tpu.vector_store %arg11[%c0_43, %c0_44], %93 {strides = array<i32>} : memref<2x16xf32, #tpu.memory_space<vmem>>, vector<2x16xf32>,
    } else {
    }
    return
  }
  func.func @transform_0(%arg0: i32) -> (i32, i32) {
    %c0_i32 = arith.constant 0 : i32
    %c0_i32_0 = arith.constant 0 : i32
    return %arg0, %c0_i32 : i32, i32
  }
  func.func @transform_1(%arg0: i32) -> (i32, i32) {
    %c0_i32 = arith.constant 0 : i32
    %c0_i32_0 = arith.constant 0 : i32
    %c0_i32_1 = arith.constant 0 : i32
    return %c0_i32, %c0_i32_0 : i32, i32
  }
  func.func @transform_2(%arg0: i32) -> (i32, i32) {
    %c0_i32 = arith.constant 0 : i32
    %c0_i32_0 = arith.constant 0 : i32
    %c0_i32_1 = arith.constant 0 : i32
    return %c0_i32, %c0_i32_0 : i32, i32
  }
  func.func @transform_3(%arg0: i32) -> (i32, i32) {
    %c0_i32 = arith.constant 0 : i32
    %c0_i32_0 = arith.constant 0 : i32
    %c0_i32_1 = arith.constant 0 : i32
    return %c0_i32, %c0_i32_0 : i32, i32
  }
  func.func @transform_4(%arg0: i32) -> (i32, i32) {
    %c0_i32 = arith.constant 0 : i32
    %c0_i32_0 = arith.constant 0 : i32
    %c0_i32_1 = arith.constant 0 : i32
    return %c0_i32, %c0_i32_0 : i32, i32
  }
  func.func @transform_5(%arg0: i32) -> (i32, i32) {
    %c0_i32 = arith.constant 0 : i32
    %c0_i32_0 = arith.constant 0 : i32
    %c0_i32_1 = arith.constant 0 : i32
    return %c0_i32, %c0_i32_0 : i32, i32
  }
  func.func @transform_6(%arg0: i32) -> (i32, i32) {
    %c0_i32 = arith.constant 0 : i32
    %c0_i32_0 = arith.constant 0 : i32
    %c0_i32_1 = arith.constant 0 : i32
    return %c0_i32, %c0_i32_0 : i32, i32
  }
  func.func @transform_7(%arg0: i32) -> (i32, i32) {
    %c0_i32 = arith.constant 0 : i32
    %c0_i32_0 = arith.constant 0 : i32
    %c0_i32_1 = arith.constant 0 : i32
    return %c0_i32, %c0_i32_0 : i32, i32
  }
  func.func @transform_8(%arg0: i32) -> (i32, i32) {
    %c0_i32 = arith.constant 0 : i32
    %c0_i32_0 = arith.constant 0 : i32
    %c0_i32_1 = arith.constant 0 : i32
    return %c0_i32, %c0_i32_0 : i32, i32
  }
  func.func @transform_9(%arg0: i32) -> (i32, i32) {
    %c0_i32 = arith.constant 0 : i32
    %c0_i32_0 = arith.constant 0 : i32
    %c0_i32_1 = arith.constant 0 : i32
    return %c0_i32, %c0_i32_0 : i32, i32
  }
  func.func @transform_10(%arg0: i32) -> (i32, i32) {
    %c0_i32 = arith.constant 0 : i32
    %c0_i32_0 = arith.constant 0 : i32
    %c0_i32_1 = arith.constant 0 : i32
    return %c0_i32, %c0_i32_0 : i32, i32
  }
}

module attributes {stable_mosaic.version = 11 : i64} {
  func.func @gmlp_out_kernel(%arg0: i32, %arg1: memref<8x16xf32, #tpu.memory_space<vmem>>, %arg2: memref<2x16xf32, #tpu.memory_space<vmem>>, %arg3: memref<1x2xi32, #tpu.memory_space<vmem>>, %arg4: memref<1x2xi32, #tpu.memory_space<vmem>>, %arg5: memref<1x1xf32, #tpu.memory_space<smem>>, %arg6: memref<1x16xf32, #tpu.memory_space<vmem>>, %arg7: memref<1x16xf32, #tpu.memory_space<vmem>>, %arg8: memref<16x32xbf16, #tpu.memory_space<vmem>>, %arg9: memref<1x32xf32, #tpu.memory_space<vmem>>, %arg10: memref<1x16xf32, #tpu.memory_space<vmem>>, %arg11: memref<1x16xf32, #tpu.memory_space<vmem>>, %arg12: memref<16x16xbf16, #tpu.memory_space<vmem>>, %arg13: memref<1x16xf32, #tpu.memory_space<vmem>>, %arg14: memref<8x16xf32, #tpu.memory_space<vmem>>) attributes {dimension_semantics = [#tpu.dimension_semantics<parallel>], iteration_bounds = array<i64: 1>, scalar_prefetch = 0 : i64, scratch_operands = 0 : i64, tpu.core_type = #tpu.core_type<tc>, window_params = [{transform_indices = @transform_0, window_bounds = array<i64: 8, 16>}, {pipeline_mode = #tpu.pipeline_mode<synchronous>, transform_indices = @transform_1, window_bounds = array<i64: 2, 16>}, {pipeline_mode = #tpu.pipeline_mode<synchronous>, transform_indices = @transform_2, window_bounds = array<i64: 1, 2>}, {pipeline_mode = #tpu.pipeline_mode<synchronous>, transform_indices = @transform_3, window_bounds = array<i64: 1, 2>}, {transform_indices = @transform_4, window_bounds = array<i64: 1, 1>}, {pipeline_mode = #tpu.pipeline_mode<synchronous>, transform_indices = @transform_5, window_bounds = array<i64: 1, 16>}, {pipeline_mode = #tpu.pipeline_mode<synchronous>, transform_indices = @transform_6, window_bounds = array<i64: 1, 16>}, {pipeline_mode = #tpu.pipeline_mode<synchronous>, transform_indices = @transform_7, window_bounds = array<i64: 16, 32>}, {pipeline_mode = #tpu.pipeline_mode<synchronous>, transform_indices = @transform_8, window_bounds = array<i64: 1, 32>}, {pipeline_mode = #tpu.pipeline_mode<synchronous>, transform_indices = @transform_9, window_bounds = array<i64: 1, 16>}, {pipeline_mode = #tpu.pipeline_mode<synchronous>, transform_indices = @transform_10, window_bounds = array<i64: 1, 16>}, {pipeline_mode = #tpu.pipeline_mode<synchronous>, transform_indices = @transform_11, window_bounds = array<i64: 16, 16>}, {pipeline_mode = #tpu.pipeline_mode<synchronous>, transform_indices = @transform_12, window_bounds = array<i64: 1, 16>}, {transform_indices = @transform_13, window_bounds = array<i64: 8, 16>}]} {
    %c8_i32 = arith.constant 8 : i32
    %0 = arith.muli %arg0, %c8_i32 : i32
    %c0 = arith.constant 0 : index
    %c0_0 = arith.constant 0 : index
    %1 = vector.load %arg1[%c0, %c0_0] : memref<8x16xf32, #tpu.memory_space<vmem>>, vector<8x16xf32>
    %c0_1 = arith.constant 0 : index
    %c0_2 = arith.constant 0 : index
    %2 = vector.load %arg6[%c0_1, %c0_2] : memref<1x16xf32, #tpu.memory_space<vmem>>, vector<1x16xf32>
    %c0_3 = arith.constant 0 : index
    %c0_4 = arith.constant 0 : index
    %3 = vector.load %arg7[%c0_3, %c0_4] : memref<1x16xf32, #tpu.memory_space<vmem>>, vector<1x16xf32>
    %cst = arith.constant dense<0.000000e+00> : vector<8xf32>
    %4 = vector.multi_reduction <add>, %1, %cst [1] : vector<8x16xf32> to vector<8xf32>
    %5 = vector.shape_cast %4 : vector<8xf32> to vector<8x1xf32>
    %cst_5 = arith.constant 1.600000e+01 : f32
    %6 = vector.broadcast %cst_5 : f32 to vector<8x1xf32>
    %7 = arith.divf %5, %6 : vector<8x1xf32>
    %8 = vector.broadcast %7 : vector<8x1xf32> to vector<8x16xf32>
    %9 = arith.subf %1, %8 : vector<8x16xf32>
    %10 = arith.mulf %9, %9 : vector<8x16xf32>
    %cst_6 = arith.constant dense<0.000000e+00> : vector<8xf32>
    %11 = vector.multi_reduction <add>, %10, %cst_6 [1] : vector<8x16xf32> to vector<8xf32>
    %12 = vector.shape_cast %11 : vector<8xf32> to vector<8x1xf32>
    %cst_7 = arith.constant 1.600000e+01 : f32
    %13 = vector.broadcast %cst_7 : f32 to vector<8x1xf32>
    %14 = arith.divf %12, %13 : vector<8x1xf32>
    %15 = vector.broadcast %7 : vector<8x1xf32> to vector<8x16xf32>
    %16 = arith.subf %1, %15 : vector<8x16xf32>
    %cst_8 = arith.constant 9.99999974E-6 : f32
    %17 = vector.broadcast %cst_8 : f32 to vector<8x1xf32>
    %18 = arith.addf %14, %17 : vector<8x1xf32>
    %19 = math.rsqrt %18 : vector<8x1xf32>
    %20 = vector.broadcast %19 : vector<8x1xf32> to vector<8x16xf32>
    %21 = arith.mulf %16, %20 : vector<8x16xf32>
    %22 = vector.broadcast %2 : vector<1x16xf32> to vector<8x16xf32>
    %23 = arith.mulf %21, %22 : vector<8x16xf32>
    %24 = vector.broadcast %3 : vector<1x16xf32> to vector<8x16xf32>
    %25 = arith.addf %23, %24 : vector<8x16xf32>
    %26 = arith.truncf %25 : vector<8x16xf32> to vector<8x16xbf16>
    %c0_9 = arith.constant 0 : index
    %c0_10 = arith.constant 0 : index
    %27 = vector.load %arg8[%c0_9, %c0_10] : memref<16x32xbf16, #tpu.memory_space<vmem>>, vector<16x32xbf16>
    %cst_11 = arith.constant dense<0.000000e+00> : vector<8x32xf32>
    %28 = tpu.matmul %26, %27, %cst_11 {dimension_numbers = #tpu.dot_dimension_numbers<[1], [0], [0], [1], [0, 0, 1, 1], [], []>} : vector<8x16xbf16>, vector<16x32xbf16>, vector<8x32xf32> -> vector<8x32xf32>
    %c0_12 = arith.constant 0 : index
    %c0_13 = arith.constant 0 : index
    %29 = vector.load %arg9[%c0_12, %c0_13] : memref<1x32xf32, #tpu.memory_space<vmem>>, vector<1x32xf32>
    %30 = vector.broadcast %29 : vector<1x32xf32> to vector<8x32xf32>
    %31 = arith.addf %28, %30 : vector<8x32xf32>
    %cst_14 = arith.constant 0.000000e+00 : f32
    %32 = vector.broadcast %cst_14 : f32 to vector<8x32xf32>
    %33 = arith.cmpf ogt, %31, %32 : vector<8x32xf32>
    %34 = math.exp %31 : vector<8x32xf32>
    %cst_15 = arith.constant 1.000000e+00 : f32
    %35 = vector.broadcast %cst_15 : f32 to vector<8x32xf32>
    %36 = arith.subf %34, %35 : vector<8x32xf32>
    %cst_16 = arith.constant 1.67326319 : f32
    %37 = vector.broadcast %cst_16 : f32 to vector<8x32xf32>
    %38 = arith.mulf %37, %36 : vector<8x32xf32>
    %39 = arith.select %33, %31, %38 : vector<8x32xi1>, vector<8x32xf32>
    %cst_17 = arith.constant 1.05070102 : f32
    %40 = vector.broadcast %cst_17 : f32 to vector<8x32xf32>
    %41 = arith.mulf %40, %39 : vector<8x32xf32>
    %42 = vector.extract_strided_slice %41 {offsets = [0, 16], sizes = [8, 16], strides = [1, 1]} : vector<8x32xf32> to vector<8x16xf32>
    %c0_18 = arith.constant 0 : index
    %c0_19 = arith.constant 0 : index
    %43 = vector.load %arg10[%c0_18, %c0_19] : memref<1x16xf32, #tpu.memory_space<vmem>>, vector<1x16xf32>
    %c0_20 = arith.constant 0 : index
    %c0_21 = arith.constant 0 : index
    %44 = vector.load %arg11[%c0_20, %c0_21] : memref<1x16xf32, #tpu.memory_space<vmem>>, vector<1x16xf32>
    %cst_22 = arith.constant dense<0.000000e+00> : vector<8xf32>
    %45 = vector.multi_reduction <add>, %42, %cst_22 [1] : vector<8x16xf32> to vector<8xf32>
    %46 = vector.shape_cast %45 : vector<8xf32> to vector<8x1xf32>
    %cst_23 = arith.constant 1.600000e+01 : f32
    %47 = vector.broadcast %cst_23 : f32 to vector<8x1xf32>
    %48 = arith.divf %46, %47 : vector<8x1xf32>
    %49 = vector.broadcast %48 : vector<8x1xf32> to vector<8x16xf32>
    %50 = arith.subf %42, %49 : vector<8x16xf32>
    %51 = arith.mulf %50, %50 : vector<8x16xf32>
    %cst_24 = arith.constant dense<0.000000e+00> : vector<8xf32>
    %52 = vector.multi_reduction <add>, %51, %cst_24 [1] : vector<8x16xf32> to vector<8xf32>
    %53 = vector.shape_cast %52 : vector<8xf32> to vector<8x1xf32>
    %cst_25 = arith.constant 1.600000e+01 : f32
    %54 = vector.broadcast %cst_25 : f32 to vector<8x1xf32>
    %55 = arith.divf %53, %54 : vector<8x1xf32>
    %56 = vector.broadcast %48 : vector<8x1xf32> to vector<8x16xf32>
    %57 = arith.subf %42, %56 : vector<8x16xf32>
    %cst_26 = arith.constant 9.99999974E-6 : f32
    %58 = vector.broadcast %cst_26 : f32 to vector<8x1xf32>
    %59 = arith.addf %55, %58 : vector<8x1xf32>
    %60 = math.rsqrt %59 : vector<8x1xf32>
    %61 = vector.broadcast %60 : vector<8x1xf32> to vector<8x16xf32>
    %62 = arith.mulf %57, %61 : vector<8x16xf32>
    %63 = vector.broadcast %43 : vector<1x16xf32> to vector<8x16xf32>
    %64 = arith.mulf %62, %63 : vector<8x16xf32>
    %65 = vector.broadcast %44 : vector<1x16xf32> to vector<8x16xf32>
    %66 = arith.addf %64, %65 : vector<8x16xf32>
    %67 = tpu.iota {dimensions = array<i32: 0>} : vector<8x2xi32>
    %68 = vector.broadcast %0 : i32 to vector<8x2xi32>
    %69 = arith.addi %68, %67 : vector<8x2xi32>
    %c0_27 = arith.constant 0 : index
    %c0_28 = arith.constant 0 : index
    %70 = vector.load %arg3[%c0_27, %c0_28] : memref<1x2xi32, #tpu.memory_space<vmem>>, vector<1x2xi32>
    %71 = vector.broadcast %70 : vector<1x2xi32> to vector<8x2xi32>
    %72 = arith.cmpi sge, %69, %71 : vector<8x2xi32>
    %c0_29 = arith.constant 0 : index
    %c0_30 = arith.constant 0 : index
    %73 = vector.load %arg4[%c0_29, %c0_30] : memref<1x2xi32, #tpu.memory_space<vmem>>, vector<1x2xi32>
    %74 = vector.broadcast %73 : vector<1x2xi32> to vector<8x2xi32>
    %75 = arith.cmpi slt, %69, %74 : vector<8x2xi32>
    %76 = arith.andi %72, %75 : vector<8x2xi1>
    %77 = arith.extui %76 : vector<8x2xi1> to vector<8x2xi32>
    %78 = arith.sitofp %77 : vector<8x2xi32> to vector<8x2xf32>
    %79 = arith.truncf %78 : vector<8x2xf32> to vector<8x2xbf16>
    %c0_31 = arith.constant 0 : index
    %c0_32 = arith.constant 0 : index
    %80 = vector.load %arg2[%c0_31, %c0_32] : memref<2x16xf32, #tpu.memory_space<vmem>>, vector<2x16xf32>
    %81 = arith.truncf %80 : vector<2x16xf32> to vector<2x16xbf16>
    %cst_33 = arith.constant dense<0.000000e+00> : vector<8x16xf32>
    %82 = tpu.matmul %79, %81, %cst_33 {dimension_numbers = #tpu.dot_dimension_numbers<[1], [0], [0], [1], [0, 0, 1, 1], [], []>} : vector<8x2xbf16>, vector<2x16xbf16>, vector<8x16xf32> -> vector<8x16xf32>
    %c0_34 = arith.constant 0 : index
    %c0_35 = arith.constant 0 : index
    %83 = memref.load %arg5[%c0_34, %c0_35] : memref<1x1xf32, #tpu.memory_space<smem>>
    %84 = vector.broadcast %83 : f32 to vector<8x16xf32>
    %85 = arith.mulf %84, %66 : vector<8x16xf32>
    %cst_36 = arith.constant 1.000000e+00 : f32
    %86 = vector.broadcast %cst_36 : f32 to vector<8x16xf32>
    %87 = arith.addf %86, %85 : vector<8x16xf32>
    %88 = arith.addf %87, %82 : vector<8x16xf32>
    %89 = vector.extract_strided_slice %41 {offsets = [0, 0], sizes = [8, 16], strides = [1, 1]} : vector<8x32xf32> to vector<8x16xf32>
    %90 = arith.mulf %89, %88 : vector<8x16xf32>
    %91 = arith.truncf %90 : vector<8x16xf32> to vector<8x16xbf16>
    %c0_37 = arith.constant 0 : index
    %c0_38 = arith.constant 0 : index
    %92 = vector.load %arg12[%c0_37, %c0_38] : memref<16x16xbf16, #tpu.memory_space<vmem>>, vector<16x16xbf16>
    %cst_39 = arith.constant dense<0.000000e+00> : vector<8x16xf32>
    %93 = tpu.matmul %91, %92, %cst_39 {dimension_numbers = #tpu.dot_dimension_numbers<[1], [0], [0], [1], [0, 0, 1, 1], [], []>} : vector<8x16xbf16>, vector<16x16xbf16>, vector<8x16xf32> -> vector<8x16xf32>
    %c0_40 = arith.constant 0 : index
    %c0_41 = arith.constant 0 : index
    %94 = vector.load %arg13[%c0_40, %c0_41] : memref<1x16xf32, #tpu.memory_space<vmem>>, vector<1x16xf32>
    %95 = vector.broadcast %94 : vector<1x16xf32> to vector<8x16xf32>
    %96 = arith.addf %93, %95 : vector<8x16xf32>
    %97 = arith.addf %1, %96 : vector<8x16xf32>
    %c0_42 = arith.constant 0 : index
    %c0_43 = arith.constant 0 : index
    %98 = vector.load %arg14[%c0_42, %c0_43] : memref<8x16xf32, #tpu.memory_space<vmem>>, vector<8x16xf32>
    tpu.vector_store %arg14[%c0_42, %c0_43], %97 {strides = array<i32>} : memref<8x16xf32, #tpu.memory_space<vmem>>, vector<8x16xf32>,
    return
  }
  func.func @transform_0(%arg0: i32) -> (i32, i32) {
    %c0_i32 = arith.constant 0 : i32
    %c0_i32_0 = arith.constant 0 : i32
    return %arg0, %c0_i32 : i32, i32
  }
  func.func @transform_1(%arg0: i32) -> (i32, i32) {
    %c0_i32 = arith.constant 0 : i32
    %c0_i32_0 = arith.constant 0 : i32
    %c0_i32_1 = arith.constant 0 : i32
    return %c0_i32, %c0_i32_0 : i32, i32
  }
  func.func @transform_2(%arg0: i32) -> (i32, i32) {
    %c0_i32 = arith.constant 0 : i32
    %c0_i32_0 = arith.constant 0 : i32
    %c0_i32_1 = arith.constant 0 : i32
    return %c0_i32, %c0_i32_0 : i32, i32
  }
  func.func @transform_3(%arg0: i32) -> (i32, i32) {
    %c0_i32 = arith.constant 0 : i32
    %c0_i32_0 = arith.constant 0 : i32
    %c0_i32_1 = arith.constant 0 : i32
    return %c0_i32, %c0_i32_0 : i32, i32
  }
  func.func @transform_4(%arg0: i32) -> (i32, i32) {
    %c0_i32 = arith.constant 0 : i32
    %c0_i32_0 = arith.constant 0 : i32
    %c0_i32_1 = arith.constant 0 : i32
    return %c0_i32, %c0_i32_0 : i32, i32
  }
  func.func @transform_5(%arg0: i32) -> (i32, i32) {
    %c0_i32 = arith.constant 0 : i32
    %c0_i32_0 = arith.constant 0 : i32
    %c0_i32_1 = arith.constant 0 : i32
    return %c0_i32, %c0_i32_0 : i32, i32
  }
  func.func @transform_6(%arg0: i32) -> (i32, i32) {
    %c0_i32 = arith.constant 0 : i32
    %c0_i32_0 = arith.constant 0 : i32
    %c0_i32_1 = arith.constant 0 : i32
    return %c0_i32, %c0_i32_0 : i32, i32
  }
  func.func @transform_7(%arg0: i32) -> (i32, i32) {
    %c0_i32 = arith.constant 0 : i32
    %c0_i32_0 = arith.constant 0 : i32
    %c0_i32_1 = arith.constant 0 : i32
    return %c0_i32, %c0_i32_0 : i32, i32
  }
  func.func @transform_8(%arg0: i32) -> (i32, i32) {
    %c0_i32 = arith.constant 0 : i32
    %c0_i32_0 = arith.constant 0 : i32
    %c0_i32_1 = arith.constant 0 : i32
    return %c0_i32, %c0_i32_0 : i32, i32
  }
  func.func @transform_9(%arg0: i32) -> (i32, i32) {
    %c0_i32 = arith.constant 0 : i32
    %c0_i32_0 = arith.constant 0 : i32
    %c0_i32_1 = arith.constant 0 : i32
    return %c0_i32, %c0_i32_0 : i32, i32
  }
  func.func @transform_10(%arg0: i32) -> (i32, i32) {
    %c0_i32 = arith.constant 0 : i32
    %c0_i32_0 = arith.constant 0 : i32
    %c0_i32_1 = arith.constant 0 : i32
    return %c0_i32, %c0_i32_0 : i32, i32
  }
  func.func @transform_11(%arg0: i32) -> (i32, i32) {
    %c0_i32 = arith.constant 0 : i32
    %c0_i32_0 = arith.constant 0 : i32
    %c0_i32_1 = arith.constant 0 : i32
    return %c0_i32, %c0_i32_0 : i32, i32
  }
  func.func @transform_12(%arg0: i32) -> (i32, i32) {
    %c0_i32 = arith.constant 0 : i32
    %c0_i32_0 = arith.constant 0 : i32
    %c0_i32_1 = arith.constant 0 : i32
    return %c0_i32, %c0_i32_0 : i32, i32
  }
  func.func @transform_13(%arg0: i32) -> (i32, i32) {
    %c0_i32 = arith.constant 0 : i32
    %c0_i32_0 = arith.constant 0 : i32
    return %arg0, %c0_i32 : i32, i32
  }
}

</mosaic_0001>

<llo_original>
// kernel: gated_mlp.4
$region0: #{gated_mlp.4}
  #allocation0 [shape = 'u32[]', space=smem, size = 0x4, offset = 0x4, fixed_abs, tag = 'smem constant byte address 0x4 - core index']
  #allocation1 [shape = 'u32[144,128]{1,0:T(1,128)}', space=vmem, size = 0x12000, scoped, tag = 'internal scratch']
  %s0 = inlined_call_operand.vmem [shape: f32[8,16], index: 0, kind: input, shape index: {}]
  %s1 = inlined_call_operand.vmem [shape: s32[2,1], index: 1, kind: input, shape index: {}]
  %s2 = inlined_call_operand.vmem [shape: s32[2,1], index: 2, kind: input, shape index: {}]
  %s3 = inlined_call_operand.vmem [shape: f32[2,1], index: 3, kind: input, shape index: {}]
  %s4 = inlined_call_operand.vmem [shape: f32[1,16], index: 4, kind: input, shape index: {}]
  %s5 = inlined_call_operand.vmem [shape: f32[1,16], index: 5, kind: input, shape index: {}]
  %s6 = inlined_call_operand.vmem [shape: bf16[16,16], index: 6, kind: input, shape index: {}]
  %s7 = inlined_call_operand.vmem [shape: f32[1,16], index: 7, kind: input, shape index: {}]
  %s8 = inlined_call_operand.vmem [shape: f32[1,16], index: 8, kind: input, shape index: {}]
  %s9 = inlined_call_operand.vmem [shape: f32[1,16], index: 9, kind: input, shape index: {}]
  %s10 = inlined_call_operand.vmem [shape: f32[2,16], index: 10, kind: output, shape index: {}]
  %s11 = sld [smem:[#allocation0]]
  $region58: #{gated_mlp.4} parent=0
    _
  %s13 = ssub.s32 1, %s11
  %s14 = scalar_select 0, %s13, %s11
  // Predicated region
  $region2: #{gated_mlp.4} parent=0 // pred_check
    _
  $region3: #{gated_mlp.4} parent=0 // pred_check_branch
    %16 = sbr.rel (0) target = $region5
  $region4: #{gated_mlp.4} parent=0 // pred_region
    _
  $region5: #{gated_mlp.4} parent=0 // pred_fallthru
    _
  // Predicated region
  $region6: #{gated_mlp.4} parent=0 // pred_check
    _
  $region7: #{gated_mlp.4} parent=0 // pred_check_branch
    %18 = sbr.rel (0) target = $region9
  $region8: #{gated_mlp.4} parent=0 // pred_region
    _
  $region9: #{gated_mlp.4} parent=0 // pred_fallthru
    _
  // Predicated region
  $region10: #{gated_mlp.4} parent=0 // pred_check
    _
  $region11: #{gated_mlp.4} parent=0 // pred_check_branch
    %20 = sbr.rel (0) target = $region13
  $region12: #{gated_mlp.4} parent=0 // pred_region
    _
  $region13: #{gated_mlp.4} parent=0 // pred_fallthru
    _
  // Predicated region
  $region14: #{gated_mlp.4} parent=0 // pred_check
    _
  $region15: #{gated_mlp.4} parent=0 // pred_check_branch
    %22 = sbr.rel (0) target = $region17
  $region16: #{gated_mlp.4} parent=0 // pred_region
    _
  $region17: #{gated_mlp.4} parent=0 // pred_fallthru
    _
  // Predicated region
  $region18: #{gated_mlp.4} parent=0 // pred_check
    _
  $region19: #{gated_mlp.4} parent=0 // pred_check_branch
    %24 = sbr.rel (0) target = $region21
  $region20: #{gated_mlp.4} parent=0 // pred_region
    _
  $region21: #{gated_mlp.4} parent=0 // pred_fallthru
    _
  // Predicated region
  $region22: #{gated_mlp.4} parent=0 // pred_check
    _
  $region23: #{gated_mlp.4} parent=0 // pred_check_branch
    %26 = sbr.rel (0) target = $region25
  $region24: #{gated_mlp.4} parent=0 // pred_region
    _
  $region25: #{gated_mlp.4} parent=0 // pred_fallthru
    _
  // Predicated region
  $region26: #{gated_mlp.4} parent=0 // pred_check
    _
  $region27: #{gated_mlp.4} parent=0 // pred_check_branch
    %28 = sbr.rel (0) target = $region29
  $region28: #{gated_mlp.4} parent=0 // pred_region
    _
  $region29: #{gated_mlp.4} parent=0 // pred_fallthru
    _
  // Predicated region
  $region30: #{gated_mlp.4} parent=0 // pred_check
    _
  $region31: #{gated_mlp.4} parent=0 // pred_check_branch
    %30 = sbr.rel (0) target = $region33
  $region32: #{gated_mlp.4} parent=0 // pred_region
    _
  $region33: #{gated_mlp.4} parent=0 // pred_fallthru
    _
  // Predicated region
  $region34: #{gated_mlp.4} parent=0 // pred_check
    _
  $region35: #{gated_mlp.4} parent=0 // pred_check_branch
    %32 = sbr.rel (0) target = $region37
  $region36: #{gated_mlp.4} parent=0 // pred_region
    _
  $region37: #{gated_mlp.4} parent=0 // pred_fallthru
    _
  // Predicated region
  $region38: #{gated_mlp.4} parent=0 // pred_check
    _
  $region39: #{gated_mlp.4} parent=0 // pred_check_branch
    %34 = sbr.rel (0) target = $region41
  $region40: #{gated_mlp.4} parent=0 // pred_region
    _
  $region41: #{gated_mlp.4} parent=0 // pred_fallthru
    _
  %s36 = smul.u32 0, 8
  %p37 = scmp.eq.s32.totalorder 0, 0
  // Predicated region
  $region42: #{gated_mlp.4} parent=0 // pred_check
    %p38 = pneg %p37
  $region43: #{gated_mlp.4} parent=0 // pred_check_branch
    %40 = sbr.rel (%p38) target = $region45
  $region44: #{gated_mlp.4} parent=0 // pred_region
    %vm41 = vcmask 123904
    %42 = vst.msk [vmem:[%s10] sm:$0x3] %vm41, 0.0
  $region45: #{gated_mlp.4} parent=0 // pred_fallthru
    _
  %v43 = vld [vmem:[%s0] sm:$0xff]
  %v44 = vld [vmem:[%s4] sm:$0x1]
  %v45 = vld [vmem:[%s5] sm:$0x1]
  %vm46 = vcmask 130048
  %v47 = vsel %vm46, %v43, 0.0
  %48 = vadd.xlane.f32.xlu0 %v47
  %v49 = vpop.xlane.xlu0 %48
  %v50 = vrcp.pop 16.0
  %v51 = vmul.f32 %v49, %v50
  %v52 = vsub.f32 %v43, %v51
  %v53 = vmul.f32 %v52, %v52
  %v54 = vsel %vm46, %v53, 0.0
  %55 = vadd.xlane.f32.xlu0 %v54
  %v56 = vpop.xlane.xlu0 %55
  %v57 = vmul.f32 %v56, %v50
  %v58 = vadd.f32 %v57, 1e-05
  %v59 = vrsqrt.pop %v58
  %v60 = vmul.f32 %v52, %v59
  %v62 = vlaneseq
  %v63 = vshrl.u32 %v62, 7
  %v64 = vsub.s32 0, %v63
  %v65 = vrot.slane %v44, %v64
  %v67 = vmul.f32 %v60, %v65
  %v69 = vlaneseq
  %v70 = vshrl.u32 %v69, 7
  %v71 = vsub.s32 0, %v70
  %v72 = vrot.slane %v45, %v71
  %v74 = vadd.f32 %v67, %v72
  %v75 = vpack.c.bf16 %v74, %v74
  %v76 = vld [vmem:[%s6] sm:$0xf]
  %v77 = vld [vmem:[%s6 + $0x4] sm:$0xf]
  %v78 = vld [vmem:[%s7] sm:$0x1]
  %v80 = vlaneseq
  %v81 = vshrl.u32 %v80, 7
  %v82 = vsub.s32 0, %v81
  %v83 = vrot.slane %v78, %v82
  %v87 = vunpack.c.l.b16 %v76
  %v88 = vunpack.c.l.b16 %v77
  %v89 = vpack.c.b16 %v88, %v87
  %v92 = vsel %vm46, %v75, 0
  %94 = vmatprep.subr.bf16.mxu0 0
  %95 = vmatpush1.bf16.msra.mxu0 0
  %96 = vmatprep.subr.bf16.mxu0 0
  %97 = vmatpush1.bf16.msra.mxu0 0
  %98 = vmatprep.subr.bf16.mxu0 0
  %99 = vmatpush1.bf16.msra.mxu0 0
  %100 = vmatprep.subr.bf16.mxu0 0
  %101 = vmatpush1.bf16.msra.mxu0 0
  %102 = vmatprep.subr.bf16.mxu0 0
  %103 = vmatpush1.bf16.msra.mxu0 0
  %104 = vmatprep.subr.bf16.mxu0 0
  %105 = vmatpush1.bf16.msra.mxu0 0
  %106 = vmatprep.subr.bf16.mxu0 0
  %107 = vmatpush1.bf16.msra.mxu0 0
  %108 = vmatprep.subr.bf16.mxu0 0
  %109 = vmatpush1.bf16.msra.mxu0 %v89
  %110 = vmatprep.subr.bf16.mxu0 0
  %111 = vmatpush2.bf16.msra.mxu0 0
  %112 = vmatprep.subr.bf16.mxu0 0
  %113 = vmatpush2.bf16.msra.mxu0 0
  %114 = vmatprep.subr.bf16.mxu0 0
  %115 = vmatpush2.bf16.msra.mxu0 0
  %116 = vmatprep.subr.bf16.mxu0 0
  %117 = vmatpush2.bf16.msra.mxu0 0
  %118 = vmatprep.subr.bf16.mxu0 0
  %119 = vmatpush2.bf16.msra.mxu0 0
  %120 = vmatprep.subr.bf16.mxu0 0
  %121 = vmatpush2.bf16.msra.mxu0 0
  %122 = vmatprep.subr.bf16.mxu0 0
  %123 = vmatpush2.bf16.msra.mxu0 0
  %124 = vmatprep.subr.bf16.mxu0 0
  %125 = vmatpush2.bf16.msra.mxu0 0
  %126 = vmatprep.mubr.bf16.mxu0 0
  %127 = vmatmul.mubr.bf16.gmra.mxu0 %v92
  %v128 = vpop.f32.mrf.mxu0
  %v129 = vadd.f32 %v83, %v128
  %v130 = vpop.f32.mrf.mxu0
  %v131 = vpop.f32.mrf.mxu0
  %v132 = vpop.f32.mrf.mxu0
  %133 = vdwg.mxu0
  %vm134 = vcmp.gt.f32.partialorder %v129, 0.0
  %v135 = vmul.f32 %v129, 1.442695
  %v136 = vpow.pop %v135
  %v137 = vsub.f32 %v136, 1.0
  %v138 = vmul.f32 %v137, 1.6732632
  %v139 = vsel %vm134, %v129, %v138
  %v140 = vmul.f32 %v139, 1.050701
  %v141 = vld [vmem:[%s8] sm:$0x1]
  %v142 = vld [vmem:[%s9] sm:$0x1]
  %v143 = vsel %vm46, %v140, 0.0
  %144 = vadd.xlane.f32.xlu0 %v143
  %v145 = vpop.xlane.xlu0 %144
  %v146 = vmul.f32 %v145, %v50
  %v147 = vsub.f32 %v140, %v146
  %v148 = vmul.f32 %v147, %v147
  %v149 = vsel %vm46, %v148, 0.0
  %150 = vadd.xlane.f32.xlu0 %v149
  %v151 = vpop.xlane.xlu0 %150
  %v152 = vmul.f32 %v151, %v50
  %v153 = vadd.f32 %v152, 1e-05
  %v154 = vrsqrt.pop %v153
  %v155 = vmul.f32 %v147, %v154
  %v157 = vlaneseq
  %v158 = vshrl.u32 %v157, 7
  %v159 = vsub.s32 0, %v158
  %v160 = vrot.slane %v141, %v159
  %v162 = vmul.f32 %v155, %v160
  %v164 = vlaneseq
  %v165 = vshrl.u32 %v164, 7
  %v166 = vsub.s32 0, %v165
  %v167 = vrot.slane %v142, %v166
  %v169 = vadd.f32 %v162, %v167
  %v170 = vlaneseq
  %v171 = vand.u32 %v170, 127
  %v172 = vstv %s36
  %v173 = vadd.s32 %v172, %v171
  %v174 = vld [vmem:[%s1] sm:$0x3]
  %175 = vset.pattern.permute.xlu0 0
  %176 = vperm.xlu0 %175, %v174
  %v177 = vpop.permute.xlu0 %176
  %vm178 = vcmp.ge.s32.totalorder %v173, %v177
  %v179 = vld [vmem:[%s2] sm:$0x3]
  %180 = vset.pattern.permute.xlu0 0
  %181 = vperm.xlu0 %180, %v179
  %v182 = vpop.permute.xlu0 %181
  %vm183 = vcmp.lt.s32.totalorder %v173, %v182
  %vm184 = vmand %vm178, %vm183
  %v185 = vsel %vm184, 1, 0
  %v186 = vcvt.s32.f32 %v185
  %v187 = vpack.c.bf16 %v186, %v186
  %v188 = vld [vmem:[%s10] sm:$0x3]
  %v189 = vpack.c.bf16 %v169, %v169
  %vm190 = vcmask 64512
  %v192 = vsel %vm190, %v187, 0
  %vm194 = vcmask 1043456
  %v196 = vsel %vm194, %v189, 0
  %198 = vmatprep.subr.bf16.mxu0 0
  %199 = vmatpush1.bf16.msra.mxu0 0
  %200 = vmatprep.subr.bf16.mxu0 0
  %201 = vmatpush1.bf16.msra.mxu0 0
  %202 = vmatprep.subr.bf16.mxu0 0
  %203 = vmatpush1.bf16.msra.mxu0 0
  %204 = vmatprep.subr.bf16.mxu0 0
  %205 = vmatpush1.bf16.msra.mxu0 0
  %206 = vmatprep.subr.bf16.mxu0 0
  %207 = vmatpush1.bf16.msra.mxu0 0
  %208 = vmatprep.subr.bf16.mxu0 0
  %209 = vmatpush1.bf16.msra.mxu0 0
  %210 = vmatprep.subr.bf16.mxu0 0
  %211 = vmatpush1.bf16.msra.mxu0 0
  %212 = vmatprep.subr.bf16.mxu0 0
  %213 = vmatpush1.bf16.msra.mxu0 %v196
  %214 = vmatprep.subr.bf16.mxu0 0
  %215 = vmatpush2.bf16.msra.mxu0 0
  %216 = vmatprep.subr.bf16.mxu0 0
  %217 = vmatpush2.bf16.msra.mxu0 0
  %218 = vmatprep.subr.bf16.mxu0 0
  %219 = vmatpush2.bf16.msra.mxu0 0
  %220 = vmatprep.subr.bf16.mxu0 0
  %221 = vmatpush2.bf16.msra.mxu0 0
  %222 = vmatprep.subr.bf16.mxu0 0
  %223 = vmatpush2.bf16.msra.mxu0 0
  %224 = vmatprep.subr.bf16.mxu0 0
  %225 = vmatpush2.bf16.msra.mxu0 0
  %226 = vmatprep.subr.bf16.mxu0 0
  %227 = vmatpush2.bf16.msra.mxu0 0
  %228 = vmatprep.subr.bf16.mxu0 0
  %229 = vmatpush2.bf16.msra.mxu0 0
  %230 = vmatprep.mubr.bf16.mxu0 0
  %231 = vmatmul.mubr.bf16.gmra.mxu0 %v192
  %v232 = vpop.f32.mrf.mxu0
  %v233 = vadd.f32 0.0, %v232
  %v234 = vpop.f32.mrf.mxu0
  %v235 = vpop.f32.mrf.mxu0
  %v236 = vpop.f32.mrf.mxu0
  %237 = vdwg.mxu0
  %v238 = vadd.f32 %v188, %v233
  %vm239 = vcmask 123904
  %240 = vst.msk [vmem:[%s10] sm:$0x3] %vm239, %v238
  // Predicated region
  $region46: #{gated_mlp.4} parent=0 // pred_check
    %p241 = pneg %p37
  $region47: #{gated_mlp.4} parent=0 // pred_check_branch
    %243 = sbr.rel (%p241) target = $region49
  $region48: #{gated_mlp.4} parent=0 // pred_region
    %v244 = vld [vmem:[%s10] sm:$0x3]
    %v245 = vld [vmem:[%s3] sm:$0x3]
    %247 = vset.pattern.permute.xlu0 0
    %248 = vperm.xlu0 %247, %v245
    %v249 = vpop.permute.xlu0 %248
    %v251 = vmul.f32 %v244, %v249
    %252 = vst.msk [vmem:[%s10] sm:$0x3] %vm239, %v251
  $region49: #{gated_mlp.4} parent=0 // pred_fallthru
    _
  // Predicated region
  $region50: #{gated_mlp.4} parent=0 // pred_check
    _
  $region51: #{gated_mlp.4} parent=0 // pred_check_branch
    %254 = sbr.rel (0) target = $region53
  $region52: #{gated_mlp.4} parent=0 // pred_region
    _
  $region53: #{gated_mlp.4} parent=0 // pred_fallthru
    _
  // Predicated region
  $region54: #{gated_mlp.4} parent=0 // pred_check
    _
  $region55: #{gated_mlp.4} parent=0 // pred_check_branch
    %256 = sbr.rel (0) target = $region57
  $region56: #{gated_mlp.4} parent=0 // pred_region
    _
  $region57: #{gated_mlp.4} parent=0 // pred_fallthru
    _

// kernel: gated_mlp.5
$region0: #{gated_mlp.5}
  #allocation0 [shape = 'u32[]', space=smem, size = 0x4, offset = 0x4, fixed_abs, tag = 'smem constant byte address 0x4 - core index']
  #allocation1 [shape = 'u32[144,128]{1,0:T(1,128)}', space=vmem, size = 0x12000, scoped, tag = 'internal scratch']
  #allocation2 [shape = 'f32[1,1]{1,0:T(1,128)S(6)}', space=smem, size = 0x200, scoped, tag = 'scoped memory for gated_mlp.5']
  %s0 = inlined_call_operand.vmem [shape: f32[8,16], index: 0, kind: input, shape index: {}, may-alias: {0,13}]
  %s1 = inlined_call_operand.vmem [shape: f32[2,16], index: 1, kind: input, shape index: {}]
  %s2 = inlined_call_operand.vmem [shape: s32[1,2], index: 2, kind: input, shape index: {}]
  %s3 = inlined_call_operand.vmem [shape: s32[1,2], index: 3, kind: input, shape index: {}]
  %s4 = inlined_call_operand.<no memory space> [shape: f32[1,1], index: 4, kind: input, shape index: {}]
  %s5 = inlined_call_operand.vmem [shape: f32[1,16], index: 5, kind: input, shape index: {}]
  %s6 = inlined_call_operand.vmem [shape: f32[1,16], index: 6, kind: input, shape index: {}]
  %s7 = inlined_call_operand.vmem [shape: bf16[16,32], index: 7, kind: input, shape index: {}]
  %s8 = inlined_call_operand.vmem [shape: f32[1,32], index: 8, kind: input, shape index: {}]
  %s9 = inlined_call_operand.vmem [shape: f32[1,16], index: 9, kind: input, shape index: {}]
  %s10 = inlined_call_operand.vmem [shape: f32[1,16], index: 10, kind: input, shape index: {}]
  %s11 = inlined_call_operand.vmem [shape: bf16[16,16], index: 11, kind: input, shape index: {}]
  %s12 = inlined_call_operand.vmem [shape: f32[1,16], index: 12, kind: input, shape index: {}]
  %s13 = inlined_call_operand.vmem [shape: f32[8,16], index: 13, kind: output, shape index: {}, may-alias: {0,13}]
  %s14 = sld [smem:[#allocation0]]
  $region62: #{gated_mlp.5} parent=0
    _
  %s16 = ssub.s32 1, %s14
  %s17 = scalar_select 0, %s16, %s14
  %18 = sst [smem:[#allocation2]] %s4
  // Predicated region
  $region2: #{gated_mlp.5} parent=0 // pred_check
    _
  $region3: #{gated_mlp.5} parent=0 // pred_check_branch
    %20 = sbr.rel (0) target = $region5
  $region4: #{gated_mlp.5} parent=0 // pred_region
    _
  $region5: #{gated_mlp.5} parent=0 // pred_fallthru
    _
  // Predicated region
  $region6: #{gated_mlp.5} parent=0 // pred_check
    _
  $region7: #{gated_mlp.5} parent=0 // pred_check_branch
    %22 = sbr.rel (0) target = $region9
  $region8: #{gated_mlp.5} parent=0 // pred_region
    _
  $region9: #{gated_mlp.5} parent=0 // pred_fallthru
    _
  // Predicated region
  $region10: #{gated_mlp.5} parent=0 // pred_check
    _
  $region11: #{gated_mlp.5} parent=0 // pred_check_branch
    %24 = sbr.rel (0) target = $region13
  $region12: #{gated_mlp.5} parent=0 // pred_region
    _
  $region13: #{gated_mlp.5} parent=0 // pred_fallthru
    _
  // Predicated region
  $region14: #{gated_mlp.5} parent=0 // pred_check
    _
  $region15: #{gated_mlp.5} parent=0 // pred_check_branch
    %26 = sbr.rel (0) target = $region17
  $region16: #{gated_mlp.5} parent=0 // pred_region
    _
  $region17: #{gated_mlp.5} parent=0 // pred_fallthru
    _
  // Predicated region
  $region18: #{gated_mlp.5} parent=0 // pred_check
    _
  $region19: #{gated_mlp.5} parent=0 // pred_check_branch
    %28 = sbr.rel (0) target = $region21
  $region20: #{gated_mlp.5} parent=0 // pred_region
    _
  $region21: #{gated_mlp.5} parent=0 // pred_fallthru
    _
  // Predicated region
  $region22: #{gated_mlp.5} parent=0 // pred_check
    _
  $region23: #{gated_mlp.5} parent=0 // pred_check_branch
    %30 = sbr.rel (0) target = $region25
  $region24: #{gated_mlp.5} parent=0 // pred_region
    _
  $region25: #{gated_mlp.5} parent=0 // pred_fallthru
    _
  // Predicated region
  $region26: #{gated_mlp.5} parent=0 // pred_check
    _
  $region27: #{gated_mlp.5} parent=0 // pred_check_branch
    %32 = sbr.rel (0) target = $region29
  $region28: #{gated_mlp.5} parent=0 // pred_region
    _
  $region29: #{gated_mlp.5} parent=0 // pred_fallthru
    _
  // Predicated region
  $region30: #{gated_mlp.5} parent=0 // pred_check
    _
  $region31: #{gated_mlp.5} parent=0 // pred_check_branch
    %34 = sbr.rel (0) target = $region33
  $region32: #{gated_mlp.5} parent=0 // pred_region
    _
  $region33: #{gated_mlp.5} parent=0 // pred_fallthru
    _
  // Predicated region
  $region34: #{gated_mlp.5} parent=0 // pred_check
    _
  $region35: #{gated_mlp.5} parent=0 // pred_check_branch
    %36 = sbr.rel (0) target = $region37
  $region36: #{gated_mlp.5} parent=0 // pred_region
    _
  $region37: #{gated_mlp.5} parent=0 // pred_fallthru
    _
  // Predicated region
  $region38: #{gated_mlp.5} parent=0 // pred_check
    _
  $region39: #{gated_mlp.5} parent=0 // pred_check_branch
    %38 = sbr.rel (0) target = $region41
  $region40: #{gated_mlp.5} parent=0 // pred_region
    _
  $region41: #{gated_mlp.5} parent=0 // pred_fallthru
    _
  // Predicated region
  $region42: #{gated_mlp.5} parent=0 // pred_check
    _
  $region43: #{gated_mlp.5} parent=0 // pred_check_branch
    %40 = sbr.rel (0) target = $region45
  $region44: #{gated_mlp.5} parent=0 // pred_region
    _
  $region45: #{gated_mlp.5} parent=0 // pred_fallthru
    _
  // Predicated region
  $region46: #{gated_mlp.5} parent=0 // pred_check
    _
  $region47: #{gated_mlp.5} parent=0 // pred_check_branch
    %42 = sbr.rel (0) target = $region49
  $region48: #{gated_mlp.5} parent=0 // pred_region
    _
  $region49: #{gated_mlp.5} parent=0 // pred_fallthru
    _
  // Predicated region
  $region50: #{gated_mlp.5} parent=0 // pred_check
    _
  $region51: #{gated_mlp.5} parent=0 // pred_check_branch
    %44 = sbr.rel (0) target = $region53
  $region52: #{gated_mlp.5} parent=0 // pred_region
    _
  $region53: #{gated_mlp.5} parent=0 // pred_fallthru
    _
  %s46 = smul.u32 0, 8
  %v47 = vld [vmem:[%s0] sm:$0xff]
  %v48 = vld [vmem:[%s5] sm:$0x1]
  %v49 = vld [vmem:[%s6] sm:$0x1]
  %vm50 = vcmask 130048
  %v51 = vsel %vm50, %v47, 0.0
  %52 = vadd.xlane.f32.xlu0 %v51
  %v53 = vpop.xlane.xlu0 %52
  %v54 = vrcp.pop 16.0
  %v55 = vmul.f32 %v53, %v54
  %v56 = vsub.f32 %v47, %v55
  %v57 = vmul.f32 %v56, %v56
  %v58 = vsel %vm50, %v57, 0.0
  %59 = vadd.xlane.f32.xlu0 %v58
  %v60 = vpop.xlane.xlu0 %59
  %v61 = vmul.f32 %v60, %v54
  %v62 = vadd.f32 %v61, 1e-05
  %v63 = vrsqrt.pop %v62
  %v64 = vmul.f32 %v56, %v63
  %v66 = vlaneseq
  %v67 = vshrl.u32 %v66, 7
  %v68 = vsub.s32 0, %v67
  %v69 = vrot.slane %v48, %v68
  %v71 = vmul.f32 %v64, %v69
  %v73 = vlaneseq
  %v74 = vshrl.u32 %v73, 7
  %v75 = vsub.s32 0, %v74
  %v76 = vrot.slane %v49, %v75
  %v78 = vadd.f32 %v71, %v76
  %v79 = vpack.c.bf16 %v78, %v78
  %v80 = vld [vmem:[%s7] sm:$0xf]
  %v81 = vld [vmem:[%s7 + $0x4] sm:$0xf]
  %v82 = vld [vmem:[%s8] sm:$0x1]
  %v84 = vlaneseq
  %v85 = vshrl.u32 %v84, 7
  %v86 = vsub.s32 0, %v85
  %v87 = vrot.slane %v82, %v86
  %v91 = vunpack.c.l.b16 %v80
  %v92 = vunpack.c.l.b16 %v81
  %v93 = vpack.c.b16 %v92, %v91
  %v96 = vsel %vm50, %v79, 0
  %98 = vmatprep.subr.bf16.mxu0 0
  %99 = vmatpush1.bf16.msra.mxu0 0
  %100 = vmatprep.subr.bf16.mxu0 0
  %101 = vmatpush1.bf16.msra.mxu0 0
  %102 = vmatprep.subr.bf16.mxu0 0
  %103 = vmatpush1.bf16.msra.mxu0 0
  %104 = vmatprep.subr.bf16.mxu0 0
  %105 = vmatpush1.bf16.msra.mxu0 0
  %106 = vmatprep.subr.bf16.mxu0 0
  %107 = vmatpush1.bf16.msra.mxu0 0
  %108 = vmatprep.subr.bf16.mxu0 0
  %109 = vmatpush1.bf16.msra.mxu0 0
  %110 = vmatprep.subr.bf16.mxu0 0
  %111 = vmatpush1.bf16.msra.mxu0 0
  %112 = vmatprep.subr.bf16.mxu0 0
  %113 = vmatpush1.bf16.msra.mxu0 %v93
  %114 = vmatprep.subr.bf16.mxu0 0
  %115 = vmatpush2.bf16.msra.mxu0 0
  %116 = vmatprep.subr.bf16.mxu0 0
  %117 = vmatpush2.bf16.msra.mxu0 0
  %118 = vmatprep.subr.bf16.mxu0 0
  %119 = vmatpush2.bf16.msra.mxu0 0
  %120 = vmatprep.subr.bf16.mxu0 0
  %121 = vmatpush2.bf16.msra.mxu0 0
  %122 = vmatprep.subr.bf16.mxu0 0
  %123 = vmatpush2.bf16.msra.mxu0 0
  %124 = vmatprep.subr.bf16.mxu0 0
  %125 = vmatpush2.bf16.msra.mxu0 0
  %126 = vmatprep.subr.bf16.mxu0 0
  %127 = vmatpush2.bf16.msra.mxu0 0
  %128 = vmatprep.subr.bf16.mxu0 0
  %129 = vmatpush2.bf16.msra.mxu0 0
  %130 = vmatprep.mubr.bf16.mxu0 0
  %131 = vmatmul.mubr.bf16.gmra.mxu0 %v96
  %v132 = vpop.f32.mrf.mxu0
  %v133 = vadd.f32 %v87, %v132
  %v134 = vpop.f32.mrf.mxu0
  %v135 = vpop.f32.mrf.mxu0
  %v136 = vpop.f32.mrf.mxu0
  %137 = vdwg.mxu0
  %vm138 = vcmp.gt.f32.partialorder %v133, 0.0
  %v139 = vmul.f32 %v133, 1.442695
  %v140 = vpow.pop %v139
  %v141 = vsub.f32 %v140, 1.0
  %v142 = vmul.f32 %v141, 1.6732632
  %v143 = vsel %vm138, %v133, %v142
  %v144 = vmul.f32 %v143, 1.050701
  %v145 = vld [vmem:[%s9] sm:$0x1]
  %v146 = vld [vmem:[%s10] sm:$0x1]
  %148 = vrot.lane.b32.xlu0 %v144, 112
  %v149 = vpop.permute.xlu0 %148
  %v151 = vsel %vm50, %v149, 0.0
  %152 = vadd.xlane.f32.xlu0 %v151
  %v153 = vpop.xlane.xlu0 %152
  %v154 = vmul.f32 %v153, %v54
  %v155 = vsub.f32 %v144, %v154
  %v156 = vmul.f32 %v155, %v155
  %158 = vrot.lane.b32.xlu0 %v156, 112
  %v159 = vpop.permute.xlu0 %158
  %v161 = vsel %vm50, %v159, 0.0
  %162 = vadd.xlane.f32.xlu0 %v161
  %v163 = vpop.xlane.xlu0 %162
  %v164 = vmul.f32 %v163, %v54
  %v165 = vadd.f32 %v164, 1e-05
  %v166 = vrsqrt.pop %v165
  %v167 = vmul.f32 %v155, %v166
  %v169 = vlaneseq
  %v170 = vshrl.u32 %v169, 7
  %v171 = vsub.s32 0, %v170
  %v172 = vrot.slane %v145, %v171
  %173 = vrot.lane.b32.xlu0 %v172, 16
  %v174 = vpop.permute.xlu0 %173
  %v176 = vmul.f32 %v167, %v174
  %v178 = vlaneseq
  %v179 = vshrl.u32 %v178, 7
  %v180 = vsub.s32 0, %v179
  %v181 = vrot.slane %v146, %v180
  %182 = vrot.lane.b32.xlu0 %v181, 16
  %v183 = vpop.permute.xlu0 %182
  %v185 = vadd.f32 %v176, %v183
  %v186 = vlaneseq
  %v187 = vshrl.u32 %v186, 7
  %v188 = vstv %s46
  %v189 = vadd.s32 %v188, %v187
  %v190 = vld [vmem:[%s2] sm:$0x1]
  %v191 = vlaneseq
  %v192 = vshrl.u32 %v191, 7
  %v193 = vsub.s32 0, %v192
  %v194 = vrot.slane %v190, %v193
  %vm195 = vcmp.ge.s32.totalorder %v189, %v194
  %v196 = vld [vmem:[%s3] sm:$0x1]
  %v197 = vlaneseq
  %v198 = vshrl.u32 %v197, 7
  %v199 = vsub.s32 0, %v198
  %v200 = vrot.slane %v196, %v199
  %vm201 = vcmp.lt.s32.totalorder %v189, %v200
  %vm202 = vmand %vm195, %vm201
  %v203 = vsel %vm202, 1, 0
  %v204 = vcvt.s32.f32 %v203
  %v205 = vpack.c.bf16 %v204, %v204
  %v206 = vld [vmem:[%s1] sm:$0x3]
  %v207 = vpack.c.bf16 %v206, %v206
  %vm208 = vcmask 15360
  %v210 = vsel %vm208, %v205, 0
  %vm212 = vcmask 1040384
  %v214 = vsel %vm212, %v207, 0
  %216 = vmatprep.subr.bf16.mxu0 0
  %217 = vmatpush1.bf16.msra.mxu0 0
  %218 = vmatprep.subr.bf16.mxu0 0
  %219 = vmatpush1.bf16.msra.mxu0 0
  %220 = vmatprep.subr.bf16.mxu0 0
  %221 = vmatpush1.bf16.msra.mxu0 0
  %222 = vmatprep.subr.bf16.mxu0 0
  %223 = vmatpush1.bf16.msra.mxu0 0
  %224 = vmatprep.subr.bf16.mxu0 0
  %225 = vmatpush1.bf16.msra.mxu0 0
  %226 = vmatprep.subr.bf16.mxu0 0
  %227 = vmatpush1.bf16.msra.mxu0 0
  %228 = vmatprep.subr.bf16.mxu0 0
  %229 = vmatpush1.bf16.msra.mxu0 0
  %230 = vmatprep.subr.bf16.mxu0 0
  %231 = vmatpush1.bf16.msra.mxu0 %v214
  %232 = vmatprep.subr.bf16.mxu0 0
  %233 = vmatpush2.bf16.msra.mxu0 0
  %234 = vmatprep.subr.bf16.mxu0 0
  %235 = vmatpush2.bf16.msra.mxu0 0
  %236 = vmatprep.subr.bf16.mxu0 0
  %237 = vmatpush2.bf16.msra.mxu0 0
  %238 = vmatprep.subr.bf16.mxu0 0
  %239 = vmatpush2.bf16.msra.mxu0 0
  %240 = vmatprep.subr.bf16.mxu0 0
  %241 = vmatpush2.bf16.msra.mxu0 0
  %242 = vmatprep.subr.bf16.mxu0 0
  %243 = vmatpush2.bf16.msra.mxu0 0
  %244 = vmatprep.subr.bf16.mxu0 0
  %245 = vmatpush2.bf16.msra.mxu0 0
  %246 = vmatprep.subr.bf16.mxu0 0
  %247 = vmatpush2.bf16.msra.mxu0 0
  %248 = vmatprep.mubr.bf16.mxu0 0
  %249 = vmatmul.mubr.bf16.gmra.mxu0 %v210
  %v250 = vpop.f32.mrf.mxu0
  %v251 = vadd.f32 0.0, %v250
  %v252 = vpop.f32.mrf.mxu0
  %v253 = vpop.f32.mrf.mxu0
  %v254 = vpop.f32.mrf.mxu0
  %255 = vdwg.mxu0
  %s256 = sld [smem:[#allocation2]]
  %v257 = vstv %s256
  %v258 = vmul.f32 %v257, %v185
  %v259 = vadd.f32 %v258, 1.0
  %261 = vrot.lane.b32.xlu0 %v251, 16
  %v262 = vpop.permute.xlu0 %261
  %v264 = vadd.f32 %v259, %v262
  %266 = vrot.lane.b32.xlu0 %v264, 112
  %v267 = vpop.permute.xlu0 %266
  %v269 = vmul.f32 %v144, %v267
  %v270 = vpack.c.bf16 %v269, %v269
  %v271 = vld [vmem:[%s11] sm:$0xf]
  %v272 = vld [vmem:[%s11 + $0x4] sm:$0xf]
  %v273 = vld [vmem:[%s12] sm:$0x1]
  %v275 = vlaneseq
  %v276 = vshrl.u32 %v275, 7
  %v277 = vsub.s32 0, %v276
  %v278 = vrot.slane %v273, %v277
  %v282 = vunpack.c.l.b16 %v271
  %v283 = vunpack.c.l.b16 %v272
  %v284 = vpack.c.b16 %v283, %v282
  %v287 = vsel %vm50, %v270, 0
  %289 = vmatprep.subr.bf16.mxu0 0
  %290 = vmatpush1.bf16.msra.mxu0 0
  %291 = vmatprep.subr.bf16.mxu0 0
  %292 = vmatpush1.bf16.msra.mxu0 0
  %293 = vmatprep.subr.bf16.mxu0 0
  %294 = vmatpush1.bf16.msra.mxu0 0
  %295 = vmatprep.subr.bf16.mxu0 0
  %296 = vmatpush1.bf16.msra.mxu0 0
  %297 = vmatprep.subr.bf16.mxu0 0
  %298 = vmatpush1.bf16.msra.mxu0 0
  %299 = vmatprep.subr.bf16.mxu0 0
  %300 = vmatpush1.bf16.msra.mxu0 0
  %301 = vmatprep.subr.bf16.mxu0 0
  %302 = vmatpush1.bf16.msra.mxu0 0
  %303 = vmatprep.subr.bf16.mxu0 0
  %304 = vmatpush1.bf16.msra.mxu0 %v284
  %305 = vmatprep.subr.bf16.mxu0 0
  %306 = vmatpush2.bf16.msra.mxu0 0
  %307 = vmatprep.subr.bf16.mxu0 0
  %308 = vmatpush2.bf16.msra.mxu0 0
  %309 = vmatprep.subr.bf16.mxu0 0
  %310 = vmatpush2.bf16.msra.mxu0 0
  %311 = vmatprep.subr.bf16.mxu0 0
  %312 = vmatpush2.bf16.msra.mxu0 0
  %313 = vmatprep.subr.bf16.mxu0 0
  %314 = vmatpush2.bf16.msra.mxu0 0
  %315 = vmatprep.subr.bf16.mxu0 0
  %316 = vmatpush2.bf16.msra.mxu0 0
  %317 = vmatprep.subr.bf16.mxu0 0
  %318 = vmatpush2.bf16.msra.mxu0 0
  %319 = vmatprep.subr.bf16.mxu0 0
  %320 = vmatpush2.bf16.msra.mxu0 0
  %321 = vmatprep.mubr.bf16.mxu0 0
  %322 = vmatmul.mubr.bf16.gmra.mxu0 %v287
  %v323 = vpop.f32.mrf.mxu0
  %v324 = vadd.f32 %v278, %v323
  %v325 = vpop.f32.mrf.mxu0
  %v326 = vpop.f32.mrf.mxu0
  %v327 = vpop.f32.mrf.mxu0
  %328 = vdwg.mxu0
  %v329 = vadd.f32 %v47, %v324
  %330 = vst.msk [vmem:[%s13] sm:$0xff] %vm50, %v329
  // Predicated region
  $region54: #{gated_mlp.5} parent=0 // pred_check
    _
  $region55: #{gated_mlp.5} parent=0 // pred_check_branch
    %332 = sbr.rel (0) target = $region57
  $region56: #{gated_mlp.5} parent=0 // pred_region
    _
  $region57: #{gated_mlp.5} parent=0 // pred_fallthru
    _
  // Predicated region
  $region58: #{gated_mlp.5} parent=0 // pred_check
    _
  $region59: #{gated_mlp.5} parent=0 // pred_check_branch
    %334 = sbr.rel (0) target = $region61
  $region60: #{gated_mlp.5} parent=0 // pred_region
    _
  $region61: #{gated_mlp.5} parent=0 // pred_fallthru
    _

// kernel: gated_mlp.7
$region0: #{gated_mlp.7}
  #allocation0 [shape = 'u32[]', space=smem, size = 0x4, offset = 0x4, fixed_abs, tag = 'smem constant byte address 0x4 - core index']
  #allocation1 [shape = 'u32[144,128]{1,0:T(1,128)}', space=vmem, size = 0x12000, scoped, tag = 'internal scratch']
  #allocation2 [shape = 'f32[1,1]{1,0:T(1,128)S(6)}', space=smem, size = 0x200, scoped, tag = 'scoped memory for gated_mlp.7']
  %s0 = inlined_call_operand.hbm [shape: f32[8,16], index: 0, kind: input, shape index: {}, may-alias: {0,13}]
  %s1 = inlined_call_operand.vmem [shape: f32[2,16], index: 1, kind: input, shape index: {}]
  %s2 = inlined_call_operand.vmem [shape: s32[1,2], index: 2, kind: input, shape index: {}]
  %s3 = inlined_call_operand.vmem [shape: s32[1,2], index: 3, kind: input, shape index: {}]
  %s4 = inlined_call_operand.<no memory space> [shape: f32[1,1], index: 4, kind: input, shape index: {}]
  %s5 = inlined_call_operand.vmem [shape: f32[1,16], index: 5, kind: input, shape index: {}]
  %s6 = inlined_call_operand.vmem [shape: f32[1,16], index: 6, kind: input, shape index: {}]
  %s7 = inlined_call_operand.vmem [shape: bf16[16,32], index: 7, kind: input, shape index: {}]
  %s8 = inlined_call_operand.vmem [shape: f32[1,32], index: 8, kind: input, shape index: {}]
  %s9 = inlined_call_operand.vmem [shape: f32[1,16], index: 9, kind: input, shape index: {}]
  %s10 = inlined_call_operand.vmem [shape: f32[1,16], index: 10, kind: input, shape index: {}]
  %s11 = inlined_call_operand.vmem [shape: bf16[16,16], index: 11, kind: input, shape index: {}]
  %s12 = inlined_call_operand.vmem [shape: f32[1,16], index: 12, kind: input, shape index: {}]
  %s13 = inlined_call_operand.hbm [shape: f32[8,16], index: 13, kind: output, shape index: {}, may-alias: {0,13}]
  %s14 = sld [smem:[#allocation0]]
  $region66: #{gated_mlp.7} parent=0
    _
  %s16 = ssub.s32 1, %s14
  %s17 = scalar_select 0, %s16, %s14
  %18 = sst [smem:[#allocation2]] %s4
  $region1: #{gated_mlp.7} parent=0
    #allocation3 [shape = 'u8[4096]{0}', space=vmem, size = 0x1000, scoped, tag = 'input window, operand 0, single buffered']
    #allocation4 [shape = 's32[1]{0}', space=sflag, size = 0x4, scoped, tag = 'scoped memory for gated_mlp.7']
    #allocation5 [shape = 's32[1]{0}', space=sflag, size = 0x4, scoped, tag = 'scoped memory for gated_mlp.7']
    #allocation6 [shape = 'u8[4096]{0}', space=vmem, size = 0x1000, scoped, tag = 'output window, operand 0, single buffered']
    %19 = vsyncpa [#allocation4], 0
    %20 = vsyncpa [#allocation5], 0
    // Predicated region
    $region2: #{gated_mlp.7} parent=1 // pred_check
      _
    $region3: #{gated_mlp.7} parent=1 // pred_check_branch
      %22 = sbr.rel (0) target = $region5
    $region4: #{gated_mlp.7} parent=1 // pred_region
      %s24 = ssub.s32 128, 128
      %25 = vsyncadd [#allocation4], %s24
      %s27 = sshll.u32 [#allocation3], 4
      %s28 = int_to_ptr.vmem [resolvable:$true] %s27
      %30 = dma.hbm_to_vmem [thread:$0]  %s0, 128, %s28, [#allocation4]
    $region5: #{gated_mlp.7} parent=1 // pred_fallthru
      _
    // Predicated region
    $region6: #{gated_mlp.7} parent=1 // pred_check
      _
    $region7: #{gated_mlp.7} parent=1 // pred_check_branch
      %32 = sbr.rel (0) target = $region9
    $region8: #{gated_mlp.7} parent=1 // pred_region
      _
    $region9: #{gated_mlp.7} parent=1 // pred_fallthru
      _
    // Predicated region
    $region10: #{gated_mlp.7} parent=1 // pred_check
      _
    $region11: #{gated_mlp.7} parent=1 // pred_check_branch
      %34 = sbr.rel (0) target = $region13
    $region12: #{gated_mlp.7} parent=1 // pred_region
      _
    $region13: #{gated_mlp.7} parent=1 // pred_fallthru
      _
    // Predicated region
    $region14: #{gated_mlp.7} parent=1 // pred_check
      _
    $region15: #{gated_mlp.7} parent=1 // pred_check_branch
      %36 = sbr.rel (0) target = $region17
    $region16: #{gated_mlp.7} parent=1 // pred_region
      _
    $region17: #{gated_mlp.7} parent=1 // pred_fallthru
      _
    // Predicated region
    $region18: #{gated_mlp.7} parent=1 // pred_check
      _
    $region19: #{gated_mlp.7} parent=1 // pred_check_branch
      %38 = sbr.rel (0) target = $region21
    $region20: #{gated_mlp.7} parent=1 // pred_region
      _
    $region21: #{gated_mlp.7} parent=1 // pred_fallthru
      _
    // Predicated region
    $region22: #{gated_mlp.7} parent=1 // pred_check
      _
    $region23: #{gated_mlp.7} parent=1 // pred_check_branch
      %40 = sbr.rel (0) target = $region25
    $region24: #{gated_mlp.7} parent=1 // pred_region
      _
    $region25: #{gated_mlp.7} parent=1 // pred_fallthru
      _
    // Predicated region
    $region26: #{gated_mlp.7} parent=1 // pred_check
      _
    $region27: #{gated_mlp.7} parent=1 // pred_check_branch
      %42 = sbr.rel (0) target = $region29
    $region28: #{gated_mlp.7} parent=1 // pred_region
      _
    $region29: #{gated_mlp.7} parent=1 // pred_fallthru
      _
    // Predicated region
    $region30: #{gated_mlp.7} parent=1 // pred_check
      _
    $region31: #{gated_mlp.7} parent=1 // pred_check_branch
      %44 = sbr.rel (0) target = $region33
    $region32: #{gated_mlp.7} parent=1 // pred_region
      _
    $region33: #{gated_mlp.7} parent=1 // pred_fallthru
      _
    // Predicated region
    $region34: #{gated_mlp.7} parent=1 // pred_check
      _
    $region35: #{gated_mlp.7} parent=1 // pred_check_branch
      %46 = sbr.rel (0) target = $region37
    $region36: #{gated_mlp.7} parent=1 // pred_region
      _
    $region37: #{gated_mlp.7} parent=1 // pred_fallthru
      _
    // Predicated region
    $region38: #{gated_mlp.7} parent=1 // pred_check
      _
    $region39: #{gated_mlp.7} parent=1 // pred_check_branch
      %48 = sbr.rel (0) target = $region41
    $region40: #{gated_mlp.7} parent=1 // pred_region
      _
    $region41: #{gated_mlp.7} parent=1 // pred_fallthru
      _
    // Predicated region
    $region42: #{gated_mlp.7} parent=1 // pred_check
      _
    $region43: #{gated_mlp.7} parent=1 // pred_check_branch
      %50 = sbr.rel (0) target = $region45
    $region44: #{gated_mlp.7} parent=1 // pred_region
      _
    $region45: #{gated_mlp.7} parent=1 // pred_fallthru
      _
    // Predicated region
    $region46: #{gated_mlp.7} parent=1 // pred_check
      _
    $region47: #{gated_mlp.7} parent=1 // pred_check_branch
      %52 = sbr.rel (0) target = $region49
    $region48: #{gated_mlp.7} parent=1 // pred_region
      _
    $region49: #{gated_mlp.7} parent=1 // pred_fallthru
      _
    // Predicated region
    $region50: #{gated_mlp.7} parent=1 // pred_check
      _
    $region51: #{gated_mlp.7} parent=1 // pred_check_branch
      %54 = sbr.rel (0) target = $region53
    $region52: #{gated_mlp.7} parent=1 // pred_region
      _
    $region53: #{gated_mlp.7} parent=1 // pred_fallthru
      _
    // Predicated region
    $region54: #{gated_mlp.7} parent=1 // pred_check
      _
    $region55: #{gated_mlp.7} parent=1 // pred_check_branch
      %56 = sbr.rel (0) target = $region57
    $region56: #{gated_mlp.7} parent=1 // pred_region
      %57 = dma.done [#allocation4], 128
    $region57: #{gated_mlp.7} parent=1 // pred_fallthru
      _
    %s59 = smul.u32 0, 8
    %v60 = vld [vmem:[#allocation3] sm:$0xff]
    %v61 = vld [vmem:[%s5] sm:$0x1]
    %v62 = vld [vmem:[%s6] sm:$0x1]
    %vm63 = vcmask 130048
    %v64 = vsel %vm63, %v60, 0.0
    %65 = vadd.xlane.f32.xlu0 %v64
    %v66 = vpop.xlane.xlu0 %65
    %v67 = vrcp.pop 16.0
    %v68 = vmul.f32 %v66, %v67
    %v69 = vsub.f32 %v60, %v68
    %v70 = vmul.f32 %v69, %v69
    %v71 = vsel %vm63, %v70, 0.0
    %72 = vadd.xlane.f32.xlu0 %v71
    %v73 = vpop.xlane.xlu0 %72
    %v74 = vmul.f32 %v73, %v67
    %v75 = vadd.f32 %v74, 1e-05
    %v76 = vrsqrt.pop %v75
    %v77 = vmul.f32 %v69, %v76
    %v79 = vlaneseq
    %v80 = vshrl.u32 %v79, 7
    %v81 = vsub.s32 0, %v80
    %v82 = vrot.slane %v61, %v81
    %v84 = vmul.f32 %v77, %v82
    %v86 = vlaneseq
    %v87 = vshrl.u32 %v86, 7
    %v88 = vsub.s32 0, %v87
    %v89 = vrot.slane %v62, %v88
    %v91 = vadd.f32 %v84, %v89
    %v92 = vpack.c.bf16 %v91, %v91
    %v93 = vld [vmem:[%s7] sm:$0xf]
    %v94 = vld [vmem:[%s7 + $0x4] sm:$0xf]
    %v95 = vld [vmem:[%s8] sm:$0x1]
    %v97 = vlaneseq
    %v98 = vshrl.u32 %v97, 7
    %v99 = vsub.s32 0, %v98
    %v100 = vrot.slane %v95, %v99
    %v104 = vunpack.c.l.b16 %v93
    %v105 = vunpack.c.l.b16 %v94
    %v106 = vpack.c.b16 %v105, %v104
    %v109 = vsel %vm63, %v92, 0
    %111 = vmatprep.subr.bf16.mxu0 0
    %112 = vmatpush1.bf16.msra.mxu0 0
    %113 = vmatprep.subr.bf16.mxu0 0
    %114 = vmatpush1.bf16.msra.mxu0 0
    %115 = vmatprep.subr.bf16.mxu0 0
    %116 = vmatpush1.bf16.msra.mxu0 0
    %117 = vmatprep.subr.bf16.mxu0 0
    %118 = vmatpush1.bf16.msra.mxu0 0
    %119 = vmatprep.subr.bf16.mxu0 0
    %120 = vmatpush1.bf16.msra.mxu0 0
    %121 = vmatprep.subr.bf16.mxu0 0
    %122 = vmatpush1.bf16.msra.mxu0 0
    %123 = vmatprep.subr.bf16.mxu0 0
    %124 = vmatpush1.bf16.msra.mxu0 0
    %125 = vmatprep.subr.bf16.mxu0 0
    %126 = vmatpush1.bf16.msra.mxu0 %v106
    %127 = vmatprep.subr.bf16.mxu0 0
    %128 = vmatpush2.bf16.msra.mxu0 0
    %129 = vmatprep.subr.bf16.mxu0 0
    %130 = vmatpush2.bf16.msra.mxu0 0
    %131 = vmatprep.subr.bf16.mxu0 0
    %132 = vmatpush2.bf16.msra.mxu0 0
    %133 = vmatprep.subr.bf16.mxu0 0
    %134 = vmatpush2.bf16.msra.mxu0 0
    %135 = vmatprep.subr.bf16.mxu0 0
    %136 = vmatpush2.bf16.msra.mxu0 0
    %137 = vmatprep.subr.bf16.mxu0 0
    %138 = vmatpush2.bf16.msra.mxu0 0
    %139 = vmatprep.subr.bf16.mxu0 0
    %140 = vmatpush2.bf16.msra.mxu0 0
    %141 = vmatprep.subr.bf16.mxu0 0
    %142 = vmatpush2.bf16.msra.mxu0 0
    %143 = vmatprep.mubr.bf16.mxu0 0
    %144 = vmatmul.mubr.bf16.gmra.mxu0 %v109
    %v145 = vpop.f32.mrf.mxu0
    %v146 = vadd.f32 %v100, %v145
    %v147 = vpop.f32.mrf.mxu0
    %v148 = vpop.f32.mrf.mxu0
    %v149 = vpop.f32.mrf.mxu0
    %150 = vdwg.mxu0
    %vm151 = vcmp.gt.f32.partialorder %v146, 0.0
    %v152 = vmul.f32 %v146, 1.442695
    %v153 = vpow.pop %v152
    %v154 = vsub.f32 %v153, 1.0
    %v155 = vmul.f32 %v154, 1.6732632
    %v156 = vsel %vm151, %v146, %v155
    %v157 = vmul.f32 %v156, 1.050701
    %v158 = vld [vmem:[%s9] sm:$0x1]
    %v159 = vld [vmem:[%s10] sm:$0x1]
    %161 = vrot.lane.b32.xlu0 %v157, 112
    %v162 = vpop.permute.xlu0 %161
    %v164 = vsel %vm63, %v162, 0.0
    %165 = vadd.xlane.f32.xlu0 %v164
    %v166 = vpop.xlane.xlu0 %165
    %v167 = vmul.f32 %v166, %v67
    %v168 = vsub.f32 %v157, %v167
    %v169 = vmul.f32 %v168, %v168
    %171 = vrot.lane.b32.xlu0 %v169, 112
    %v172 = vpop.permute.xlu0 %171
    %v174 = vsel %vm63, %v172, 0.0
    %175 = vadd.xlane.f32.xlu0 %v174
    %v176 = vpop.xlane.xlu0 %175
    %v177 = vmul.f32 %v176, %v67
    %v178 = vadd.f32 %v177, 1e-05
    %v179 = vrsqrt.pop %v178
    %v180 = vmul.f32 %v168, %v179
    %v182 = vlaneseq
    %v183 = vshrl.u32 %v182, 7
    %v184 = vsub.s32 0, %v183
    %v185 = vrot.slane %v158, %v184
    %186 = vrot.lane.b32.xlu0 %v185, 16
    %v187 = vpop.permute.xlu0 %186
    %v189 = vmul.f32 %v180, %v187
    %v191 = vlaneseq
    %v192 = vshrl.u32 %v191, 7
    %v193 = vsub.s32 0, %v192
    %v194 = vrot.slane %v159, %v193
    %195 = vrot.lane.b32.xlu0 %v194, 16
    %v196 = vpop.permute.xlu0 %195
    %v198 = vadd.f32 %v189, %v196
    %v199 = vlaneseq
    %v200 = vshrl.u32 %v199, 7
    %v201 = vstv %s59
    %v202 = vadd.s32 %v201, %v200
    %v203 = vld [vmem:[%s2] sm:$0x1]
    %v204 = vlaneseq
    %v205 = vshrl.u32 %v204, 7
    %v206 = vsub.s32 0, %v205
    %v207 = vrot.slane %v203, %v206
    %vm208 = vcmp.ge.s32.totalorder %v202, %v207
    %v209 = vld [vmem:[%s3] sm:$0x1]
    %v210 = vlaneseq
    %v211 = vshrl.u32 %v210, 7
    %v212 = vsub.s32 0, %v211
    %v213 = vrot.slane %v209, %v212
    %vm214 = vcmp.lt.s32.totalorder %v202, %v213
    %vm215 = vmand %vm208, %vm214
    %v216 = vsel %vm215, 1, 0
    %v217 = vcvt.s32.f32 %v216
    %v218 = vpack.c.bf16 %v217, %v217
    %v219 = vld [vmem:[%s1] sm:$0x3]
    %v220 = vpack.c.bf16 %v219, %v219
    %vm221 = vcmask 15360
    %v223 = vsel %vm221, %v218, 0
    %vm225 = vcmask 1040384
    %v227 = vsel %vm225, %v220, 0
    %229 = vmatprep.subr.bf16.mxu0 0
    %230 = vmatpush1.bf16.msra.mxu0 0
    %231 = vmatprep.subr.bf16.mxu0 0
    %232 = vmatpush1.bf16.msra.mxu0 0
    %233 = vmatprep.subr.bf16.mxu0 0
    %234 = vmatpush1.bf16.msra.mxu0 0
    %235 = vmatprep.subr.bf16.mxu0 0
    %236 = vmatpush1.bf16.msra.mxu0 0
    %237 = vmatprep.subr.bf16.mxu0 0
    %238 = vmatpush1.bf16.msra.mxu0 0
    %239 = vmatprep.subr.bf16.mxu0 0
    %240 = vmatpush1.bf16.msra.mxu0 0
    %241 = vmatprep.subr.bf16.mxu0 0
    %242 = vmatpush1.bf16.msra.mxu0 0
    %243 = vmatprep.subr.bf16.mxu0 0
    %244 = vmatpush1.bf16.msra.mxu0 %v227
    %245 = vmatprep.subr.bf16.mxu0 0
    %246 = vmatpush2.bf16.msra.mxu0 0
    %247 = vmatprep.subr.bf16.mxu0 0
    %248 = vmatpush2.bf16.msra.mxu0 0
    %249 = vmatprep.subr.bf16.mxu0 0
    %250 = vmatpush2.bf16.msra.mxu0 0
    %251 = vmatprep.subr.bf16.mxu0 0
    %252 = vmatpush2.bf16.msra.mxu0 0
    %253 = vmatprep.subr.bf16.mxu0 0
    %254 = vmatpush2.bf16.msra.mxu0 0
    %255 = vmatprep.subr.bf16.mxu0 0
    %256 = vmatpush2.bf16.msra.mxu0 0
    %257 = vmatprep.subr.bf16.mxu0 0
    %258 = vmatpush2.bf16.msra.mxu0 0
    %259 = vmatprep.subr.bf16.mxu0 0
    %260 = vmatpush2.bf16.msra.mxu0 0
    %261 = vmatprep.mubr.bf16.mxu0 0
    %262 = vmatmul.mubr.bf16.gmra.mxu0 %v223
    %v263 = vpop.f32.mrf.mxu0
    %v264 = vadd.f32 0.0, %v263
    %v265 = vpop.f32.mrf.mxu0
    %v266 = vpop.f32.mrf.mxu0
    %v267 = vpop.f32.mrf.mxu0
    %268 = vdwg.mxu0
    %s269 = sld [smem:[#allocation2]]
    %v270 = vstv %s269
    %v271 = vmul.f32 %v270, %v198
    %v272 = vadd.f32 %v271, 1.0
    %274 = vrot.lane.b32.xlu0 %v264, 16
    %v275 = vpop.permute.xlu0 %274
    %v277 = vadd.f32 %v272, %v275
    %279 = vrot.lane.b32.xlu0 %v277, 112
    %v280 = vpop.permute.xlu0 %279
    %v282 = vmul.f32 %v157, %v280
    %v283 = vpack.c.bf16 %v282, %v282
    %v284 = vld [vmem:[%s11] sm:$0xf]
    %v285 = vld [vmem:[%s11 + $0x4] sm:$0xf]
    %v286 = vld [vmem:[%s12] sm:$0x1]
    %v288 = vlaneseq
    %v289 = vshrl.u32 %v288, 7
    %v290 = vsub.s32 0, %v289
    %v291 = vrot.slane %v286, %v290
    %v295 = vunpack.c.l.b16 %v284
    %v296 = vunpack.c.l.b16 %v285
    %v297 = vpack.c.b16 %v296, %v295
    %v300 = vsel %vm63, %v283, 0
    %302 = vmatprep.subr.bf16.mxu0 0
    %303 = vmatpush1.bf16.msra.mxu0 0
    %304 = vmatprep.subr.bf16.mxu0 0
    %305 = vmatpush1.bf16.msra.mxu0 0
    %306 = vmatprep.subr.bf16.mxu0 0
    %307 = vmatpush1.bf16.msra.mxu0 0
    %308 = vmatprep.subr.bf16.mxu0 0
    %309 = vmatpush1.bf16.msra.mxu0 0
    %310 = vmatprep.subr.bf16.mxu0 0
    %311 = vmatpush1.bf16.msra.mxu0 0
    %312 = vmatprep.subr.bf16.mxu0 0
    %313 = vmatpush1.bf16.msra.mxu0 0
    %314 = vmatprep.subr.bf16.mxu0 0
    %315 = vmatpush1.bf16.msra.mxu0 0
    %316 = vmatprep.subr.bf16.mxu0 0
    %317 = vmatpush1.bf16.msra.mxu0 %v297
    %318 = vmatprep.subr.bf16.mxu0 0
    %319 = vmatpush2.bf16.msra.mxu0 0
    %320 = vmatprep.subr.bf16.mxu0 0
    %321 = vmatpush2.bf16.msra.mxu0 0
    %322 = vmatprep.subr.bf16.mxu0 0
    %323 = vmatpush2.bf16.msra.mxu0 0
    %324 = vmatprep.subr.bf16.mxu0 0
    %325 = vmatpush2.bf16.msra.mxu0 0
    %326 = vmatprep.subr.bf16.mxu0 0
    %327 = vmatpush2.bf16.msra.mxu0 0
    %328 = vmatprep.subr.bf16.mxu0 0
    %329 = vmatpush2.bf16.msra.mxu0 0
    %330 = vmatprep.subr.bf16.mxu0 0
    %331 = vmatpush2.bf16.msra.mxu0 0
    %332 = vmatprep.subr.bf16.mxu0 0
    %333 = vmatpush2.bf16.msra.mxu0 0
    %334 = vmatprep.mubr.bf16.mxu0 0
    %335 = vmatmul.mubr.bf16.gmra.mxu0 %v300
    %v336 = vpop.f32.mrf.mxu0
    %v337 = vadd.f32 %v291, %v336
    %v338 = vpop.f32.mrf.mxu0
    %v339 = vpop.f32.mrf.mxu0
    %v340 = vpop.f32.mrf.mxu0
    %341 = vdwg.mxu0
    %v342 = vadd.f32 %v60, %v337
    %343 = vst.msk [vmem:[#allocation6] sm:$0xff] %vm63, %v342
    // Predicated region
    $region58: #{gated_mlp.7} parent=1 // pred_check
      _
    $region59: #{gated_mlp.7} parent=1 // pred_check_branch
      %345 = sbr.rel (0) target = $region61
    $region60: #{gated_mlp.7} parent=1 // pred_region
      %s347 = ssub.s32 128, 128
      %348 = vsyncadd [#allocation5], %s347
      %s350 = sshll.u32 [#allocation6], 4
      %s351 = int_to_ptr.vmem [resolvable:$true] %s350
      %353 = dma.vmem_to_hbm [thread:$0]  %s351, 128, %s13, [#allocation5]
    $region61: #{gated_mlp.7} parent=1 // pred_fallthru
      _
    // Predicated region
    $region62: #{gated_mlp.7} parent=1 // pred_check
      _
    $region63: #{gated_mlp.7} parent=1 // pred_check_branch
      %355 = sbr.rel (0) target = $region65
    $region64: #{gated_mlp.7} parent=1 // pred_region
      %356 = dma.done [#allocation5], 128
    $region65: #{gated_mlp.7} parent=1 // pred_fallthru
      _
    %357 = vsyncpa [#allocation4], 1
    %358 = vsyncpa [#allocation5], 1

</llo_original>
